<compile_context>
chip_gen: v7x
topology: tpu7x:2x2x1
jax: 0.10.0
libtpu: 0.0.40
codegen_flags: <defaults>
</compile_context>

<pallas_src>
import jax
import jax.numpy as jnp
from jax import lax
from jax.experimental import pallas as pl
from jax.experimental.pallas import tpu as pltpu


def ex2vec_kernel(scal_ref, pred_ref, hist_ref, side_ref, out_ref):
    half_smooth = scal_ref[0]   # 0.5 * smooth
    half_fs = scal_ref[1]       # 0.5 * force * smooth
    alpha = scal_ref[2]
    beta = scal_ref[3]

    p_t = pred_ref[...]                              # (TB, D, PP)  embed dtype
    h = hist_ref[...]                                # (TB, HE, D)  embed dtype (row 0 = user)
    side = side_ref[...]                             # (TB, 3, K)   f32 packed side inputs
    HE = h.shape[1]
    PP = p_t.shape[2]

    tdw_half = side[:, 0, :HE]                       # 0.5*inv_den*lamb*rsqrt(td+cutoff)*w
    bias = side[:, 1, :PP]                           # gamma + user_bias + item_bias
    tdw_hsum = side[:, 2, 0:1]                       # (TB, 1)  hoisted 0.5*sum_h term

    # Squared norms from the same values that feed the MXU (self-consistent
    # cancellation: identical history/pred items still give dist == 0).
    p32 = p_t.astype(jnp.float32)
    h32 = h.astype(jnp.float32)
    pn = jnp.sum(p32 * p32, axis=1)                  # (TB, PP)
    hn = jnp.sum(h32 * h32, axis=2)                  # (TB, HE)

    # Gram matmul in native (M,K)x(K,N) orientation; f32 accumulation.
    prec = lax.Precision.HIGHEST if p_t.dtype == jnp.float32 else None
    hp = jnp.einsum('bhd,bdp->bhp', h, p_t,
                    preferred_element_type=jnp.float32,
                    precision=prec)                  # (TB, HE, PP)

    d2 = jnp.maximum(hn[:, :, None] + pn[:, None, :] - 2.0 * hp, 0.0)
    dist = jnp.sqrt(d2)                              # (TB, HE, PP)

    # row 0 of the extended history is the user embedding -> user->item distance
    dist_ui = dist[:, 0, :]                          # (TB, PP)

    # sigmoid(x) = 0.5*tanh(0.5*x) + 0.5; the 0.5s, inv_den and lamb are folded
    # into half_smooth / half_fs / tdw_half / tdw_hsum in the wrapper.
    arg = half_smooth * pl.reciprocal(1.0 + dist, approx=True) - half_fs
    act = jnp.tanh(arg)                              # (TB, HE, PP)

    # TODO(synk): for very large H*P tiles a fori_loop over H (accumulating wsum
    # per h-slab) would bound the f32 temporaries; only worth it if spills show.
    wsum = jnp.sum(tdw_half[:, :, None] * act, axis=1) + tdw_hsum   # (TB, PP)

    output = jnp.maximum(dist_ui - wsum, 0.0)        # (TB, PP)
    out_ref[...] = alpha * output + beta * (output * output) + bias


def _round_up(x, m):
    return -(-x // m) * m


def _vmem_budget_bytes():
    """Per-generation (budget, vmem_limit). Fallback is safe on v7x (64 MiB/TC)."""
    try:
        kind = jax.devices()[0].device_kind.lower()
    except Exception:
        kind = ""
    if "v6" in kind:
        return 40 << 20, 96 << 20     # v6e: 128 MiB VMEM -> large tiles
    if "v5" in kind:
        return 32 << 20, 64 << 20     # v5e: 128 MiB VMEM, lowest HBM BW
    return 24 << 20, 48 << 20         # v7x / unknown: 64 MiB per TensorCore


def _choose_block_batch(B, PP, HE, D, K, itemsize, budget_bytes):
    """Batch tile TB and block count nb. nb is kept even (>=2) for multi-block
    cases so the 'parallel' batch axis splits across v7x's two TensorCores."""
    per_ex = (2 * itemsize * (D * PP + HE * D)        # pred_t + hist_ext, dbl-buffered
              + 2 * 4 * (3 * K + PP)                  # side + output, dbl-buffered
              + 4 * (3 * HE * PP                      # hp / dist / act chain (f32)
                     + D * PP + HE * D                # f32 casts for the norms
                     + HE + 4 * PP))                  # pn/hn/wsum/dist_ui/output
    tb = max(8, int(budget_bytes // max(per_ex, 1)))
    if B <= 16 and tb >= B:
        return B, 1                                   # single full-batch block
    tb = min(tb, _round_up(B, 8), 1024)
    tb = (tb // 8) * 8
    nb = -(-B // tb)
    nb = max(2, nb + (nb & 1))                        # even and >= 2
    tb = _round_up(-(-B // nb), 8)
    return tb, nb


def ex2vec_forward(params, user_index, pred_item_indices, history_item_indices,
                   history_timedeltas, history_weights, *,
                   embed_dtype=jnp.bfloat16):
    B, P = pred_item_indices.shape
    H = history_item_indices.shape[1]
    D = params["embedding_item"].shape[1]

    # Pad P only to a multiple of 8 (128 only when already large) - do NOT
    # inflate the gathered embedding stream for small P.
    PP = _round_up(P, 128) if P >= 128 else _round_up(P, 8)
    HE = _round_up(H + 1, 8)            # history + user row, sublane-aligned
    K = max(PP, HE)
    itemsize = jnp.dtype(embed_dtype).itemsize
    budget, vmem_limit = _vmem_budget_bytes()
    TB, nb = _choose_block_batch(B, PP, HE, D, K, itemsize, budget)
    B_pad = TB * nb

    def pad_batch(x):
        if B_pad == B:
            return x
        return jnp.pad(x, [(0, B_pad - B)] + [(0, 0)] * (x.ndim - 1))

    pred_idx = pad_batch(jnp.pad(pred_item_indices, ((0, 0), (0, PP - P))))
    user_idx = pad_batch(user_index)
    hist_idx = pad_batch(history_item_indices)
    td = pad_batch(history_timedeltas.astype(jnp.float32))
    w = pad_batch(history_weights.astype(jnp.float32))

    # --- glue: data-dependent embedding gathers + per-example folding (plain JAX) ---
    user_emb = params["embedding_user"][user_idx]                     # (B_pad, D)
    pred_emb = params["embedding_item"][pred_idx]                     # (B_pad, PP, D)
    hist_emb = params["embedding_item"][hist_idx]                     # (B_pad, H, D)

    # user embedding becomes row 0 of the extended history -> its distance comes
    # out of the same Gram matmul (one fewer stream and temporary).
    hist_ext = jnp.concatenate([user_emb[:, None, :], hist_emb], axis=1)
    hist_ext = jnp.pad(hist_ext, ((0, 0), (0, HE - (H + 1)), (0, 0)))
    hist_ext = hist_ext.astype(embed_dtype)                           # (B_pad, HE, D)

    # pred items pre-transposed to (D, PP): native MXU orientation for the Gram.
    pred_t = jnp.swapaxes(pred_emb, 1, 2).astype(embed_dtype)         # (B_pad, D, PP)

    smooth = jnp.asarray(params["smooth"], jnp.float32)
    force = jnp.asarray(params["force"], jnp.float32)
    fs = force * smooth
    inv_den = 1.0 / jax.nn.sigmoid(smooth - fs)        # constant denominator
    lamb = (params["global_lamb"] + params["user_lamb"][user_idx, 0]).astype(jnp.float32)

    # sigmoid(x) = 0.5*tanh(x/2) + 0.5 in-kernel: fold 0.5, inv_den and lamb into
    # the per-history coefficient and hoist the constant +0.5*sum term.
    coeff = (0.5 * inv_den) * lamb[:, None] * lax.rsqrt(td + params["cutoff"]) * w   # (B_pad, H)
    tdw_hsum = jnp.sum(coeff, axis=1)                                  # (B_pad,)

    bias = (params["gamma"] + params["user_bias"][user_idx, 0][:, None]
            + params["item_bias"][pred_idx, 0]).astype(jnp.float32)    # (B_pad, PP)

    # Pack the small per-example side inputs into ONE f32 stream.
    side = jnp.zeros((B_pad, 3, K), jnp.float32)
    side = side.at[:, 0, 1:H + 1].set(coeff)     # row 0 of hist_ext is the user -> coeff 0
    side = side.at[:, 1, :PP].set(bias)
    side = side.at[:, 2, 0].set(tdw_hsum)

    scalars = jnp.stack([0.5 * smooth, 0.5 * fs,
                         jnp.asarray(params["alpha"], jnp.float32),
                         jnp.asarray(params["beta"], jnp.float32)])    # (4,)

    grid_spec = pltpu.PrefetchScalarGridSpec(
        num_scalar_prefetch=0,
        grid=(nb,),
        in_specs=[
            pl.BlockSpec(memory_space=pltpu.MemorySpace.SMEM),         # scalar params
            pl.BlockSpec((TB, D, PP), lambda i: (i, 0, 0)),            # pred_t
            pl.BlockSpec((TB, HE, D), lambda i: (i, 0, 0)),            # hist_ext (+user)
            pl.BlockSpec((TB, 3, K), lambda i: (i, 0, 0)),             # packed side inputs
        ],
        out_specs=pl.BlockSpec((TB, PP), lambda i: (i, 0)),
    )

    out = pl.pallas_call(
        ex2vec_kernel,
        out_shape=jax.ShapeDtypeStruct((B_pad, PP), jnp.float32),
        grid_spec=grid_spec,
        compiler_params=pltpu.CompilerParams(
            dimension_semantics=("parallel",),
            vmem_limit_bytes=int(vmem_limit)),
    )(scalars, pred_t, hist_ext, side)

    return out[:B, :P]


def ex2vec_reference(params, user_index, pred_item_indices,
                     history_item_indices, history_timedeltas, history_weights):
    # pure-JAX transcription of the PyTorch forward (validation only)
    sig = jax.nn.sigmoid
    user_emb = params["embedding_user"][user_index][:, None, :]
    pred_emb = params["embedding_item"][pred_item_indices]
    dist_ui = jnp.linalg.norm(user_emb - pred_emb, axis=2)
    hist_emb = params["embedding_item"][history_item_indices]
    dist = jnp.linalg.norm(pred_emb[:, None, :, :] - hist_emb[:, :, None, :], axis=-1)
    dist = sig(params["smooth"] / (1 + dist) - params["force"] * params["smooth"]) \
        / sig(params["smooth"] - params["force"] * params["smooth"])
    td = (history_timedeltas + params["cutoff"]) ** (-0.5)
    td = td * history_weights
    result = td[:, :, None] * dist
    lamb = params["global_lamb"] + params["user_lamb"][user_index]   # (B, 1)
    result = lamb[:, :, None] * result
    result = jnp.sum(result, axis=1)
    output = jnp.maximum(jnp.zeros_like(dist_ui), dist_ui - result)
    u_bias = params["user_bias"][user_index]
    i_bias = params["item_bias"][pred_item_indices][..., 0]
    return (params["alpha"] * output + params["beta"] * output ** 2
            + params["gamma"] + u_bias + i_bias)


if __name__ == "__main__":
    key = jax.random.PRNGKey(0)
    n_users, n_items, D = 10, 20, 32
    B, P, H = 4, 16, 8

    ks = jax.random.split(key, 9)
    params = {
        "embedding_user": jax.random.normal(ks[0], (n_users + 1, D), jnp.float32),
        "embedding_item": jax.random.normal(ks[1], (n_items + 1, D), jnp.float32),
        "user_lamb": jax.random.normal(ks[2], (n_users + 1, 1), jnp.float32),
        "user_bias": jax.random.normal(ks[3], (n_users + 1, 1), jnp.float32),
        "item_bias": jax.random.normal(ks[4], (n_items + 1, 1), jnp.float32),
        "global_lamb": jnp.float32(1.0),
        "alpha": jnp.float32(1.0),
        "beta": jnp.float32(-0.065),
        "gamma": jnp.float32(0.5),
        "cutoff": jnp.float32(3.0),
        "smooth": jnp.float32(1.0),
        "force": jnp.float32(1.0),
    }

    user_index = jax.random.randint(ks[5], (B,), 0, n_users + 1)
    pred_item_indices = jax.random.randint(ks[6], (B, P), 0, n_items + 1)
    history_item_indices = jax.random.randint(ks[7], (B, H), 0, n_items + 1)
    history_timedeltas = jax.random.uniform(ks[8], (B, H), jnp.float32, 0.0, 100.0)
    history_weights = jnp.ones((B, H), jnp.float32)

    ref = ex2vec_reference(params, user_index, pred_item_indices,
                           history_item_indices, history_timedeltas,
                           history_weights)

    # f32 embedding path (tight-ish check; Gram-trick distance + approx recip)
    out_f32 = ex2vec_forward(params, user_index, pred_item_indices,
                             history_item_indices, history_timedeltas,
                             history_weights, embed_dtype=jnp.float32)
    out_f32 = jax.block_until_ready(out_f32)
    assert out_f32.shape == (B, P)
    assert jnp.allclose(out_f32, ref, rtol=1e-2, atol=1e-2), "f32 mismatch vs reference"

    # bf16 embedding path (default: halved HBM traffic; norms come from the same
    # bf16 values as the matmul, so exact matches still give dist == 0)
    out_bf16 = ex2vec_forward(params, user_index, pred_item_indices,
                              history_item_indices, history_timedeltas,
                              history_weights, embed_dtype=jnp.bfloat16)
    out_bf16 = jax.block_until_ready(out_bf16)
    assert out_bf16.shape == (B, P)
    assert jnp.allclose(out_bf16, ref, rtol=5e-2, atol=5e-2), "bf16 mismatch vs reference"

    print("KERNEL_OK")
</pallas_src>

<mosaic_0001>
module attributes {stable_mosaic.version = 11 : i64} {
  func.func @ex2vec_kernel(%arg0: i32, %arg1: memref<4xf32, #tpu.memory_space<smem>>, %arg2: memref<4x32x16xf32, #tpu.memory_space<vmem>>, %arg3: memref<4x16x32xf32, #tpu.memory_space<vmem>>, %arg4: memref<4x3x16xf32, #tpu.memory_space<vmem>>, %arg5: memref<4x16xf32, #tpu.memory_space<vmem>>) attributes {dimension_semantics = [#tpu.dimension_semantics<parallel>], iteration_bounds = array<i64: 1>, scalar_prefetch = 0 : i64, scratch_operands = 0 : i64, tpu.core_type = #tpu.core_type<tc>, window_params = [{transform_indices = @transform_0, window_bounds = array<i64: 4>}, {transform_indices = @transform_1, window_bounds = array<i64: 4, 32, 16>}, {transform_indices = @transform_2, window_bounds = array<i64: 4, 16, 32>}, {transform_indices = @transform_3, window_bounds = array<i64: 4, 3, 16>}, {transform_indices = @transform_4, window_bounds = array<i64: 4, 16>}]} {
    %c0 = arith.constant 0 : index
    %0 = memref.load %arg1[%c0] : memref<4xf32, #tpu.memory_space<smem>>
    %c1 = arith.constant 1 : index
    %1 = memref.load %arg1[%c1] : memref<4xf32, #tpu.memory_space<smem>>
    %c2 = arith.constant 2 : index
    %2 = memref.load %arg1[%c2] : memref<4xf32, #tpu.memory_space<smem>>
    %c3 = arith.constant 3 : index
    %3 = memref.load %arg1[%c3] : memref<4xf32, #tpu.memory_space<smem>>
    %c0_0 = arith.constant 0 : index
    %c0_1 = arith.constant 0 : index
    %c0_2 = arith.constant 0 : index
    %4 = vector.load %arg2[%c0_0, %c0_1, %c0_2] : memref<4x32x16xf32, #tpu.memory_space<vmem>>, vector<4x32x16xf32>
    %c0_3 = arith.constant 0 : index
    %c0_4 = arith.constant 0 : index
    %c0_5 = arith.constant 0 : index
    %5 = vector.load %arg3[%c0_3, %c0_4, %c0_5] : memref<4x16x32xf32, #tpu.memory_space<vmem>>, vector<4x16x32xf32>
    %c0_6 = arith.constant 0 : index
    %c0_7 = arith.constant 0 : index
    %c0_8 = arith.constant 0 : index
    %6 = vector.load %arg4[%c0_6, %c0_7, %c0_8] : memref<4x3x16xf32, #tpu.memory_space<vmem>>, vector<4x3x16xf32>
    %7 = vector.extract_strided_slice %6 {offsets = [0, 0, 0], sizes = [4, 1, 16], strides = [1, 1, 1]} : vector<4x3x16xf32> to vector<4x1x16xf32>
    %8 = vector.shape_cast %7 : vector<4x1x16xf32> to vector<4x16xf32>
    %9 = vector.extract_strided_slice %6 {offsets = [0, 1, 0], sizes = [4, 1, 16], strides = [1, 1, 1]} : vector<4x3x16xf32> to vector<4x1x16xf32>
    %10 = vector.shape_cast %9 : vector<4x1x16xf32> to vector<4x16xf32>
    %11 = vector.extract_strided_slice %6 {offsets = [0, 2, 0], sizes = [4, 1, 1], strides = [1, 1, 1]} : vector<4x3x16xf32> to vector<4x1x1xf32>
    %12 = vector.shape_cast %11 : vector<4x1x1xf32> to vector<4x1xf32>
    %13 = arith.mulf %4, %4 : vector<4x32x16xf32>
    %cst = arith.constant dense<0.000000e+00> : vector<4x16xf32>
    %14 = vector.multi_reduction <add>, %13, %cst [1] : vector<4x32x16xf32> to vector<4x16xf32>
    %15 = arith.mulf %5, %5 : vector<4x16x32xf32>
    %cst_9 = arith.constant dense<0.000000e+00> : vector<4x16xf32>
    %16 = vector.multi_reduction <add>, %15, %cst_9 [2] : vector<4x16x32xf32> to vector<4x16xf32>
    "tpu.trace_start"() <{level = 10 : i32, message = "bhd,bdp->bhp"}> : () -> ()
    %cst_10 = arith.constant dense<0.000000e+00> : vector<4x16x16xf32>
    %17 = tpu.matmul %5, %4, %cst_10 {dimension_numbers = #tpu.dot_dimension_numbers<[2], [1], [1], [2], [0, 0, 0, 1, 1, 2], [0], [0]>, precision = #tpu.contract_precision<fp32>} : vector<4x16x32xf32>, vector<4x32x16xf32>, vector<4x16x16xf32> -> vector<4x16x16xf32>
    "tpu.trace_stop"() : () -> ()
    %18 = vector.shape_cast %16 : vector<4x16xf32> to vector<4x16x1xf32>
    %19 = vector.shape_cast %14 : vector<4x16xf32> to vector<4x1x16xf32>
    %20 = vector.broadcast %18 : vector<4x16x1xf32> to vector<4x16x16xf32>
    %21 = vector.broadcast %19 : vector<4x1x16xf32> to vector<4x16x16xf32>
    %22 = arith.addf %20, %21 : vector<4x16x16xf32>
    %cst_11 = arith.constant 2.000000e+00 : f32
    %23 = vector.broadcast %cst_11 : f32 to vector<4x16x16xf32>
    %24 = arith.mulf %23, %17 : vector<4x16x16xf32>
    %25 = arith.subf %22, %24 : vector<4x16x16xf32>
    %cst_12 = arith.constant 0.000000e+00 : f32
    %26 = vector.broadcast %cst_12 : f32 to vector<4x16x16xf32>
    %27 = arith.maximumf %25, %26 : vector<4x16x16xf32>
    %28 = math.sqrt %27 : vector<4x16x16xf32>
    %29 = vector.extract_strided_slice %28 {offsets = [0, 0, 0], sizes = [4, 1, 16], strides = [1, 1, 1]} : vector<4x16x16xf32> to vector<4x1x16xf32>
    %30 = vector.shape_cast %29 : vector<4x1x16xf32> to vector<4x16xf32>
    %cst_13 = arith.constant 1.000000e+00 : f32
    %31 = vector.broadcast %cst_13 : f32 to vector<4x16x16xf32>
    %32 = arith.addf %31, %28 : vector<4x16x16xf32>
    %33 = tpu.reciprocal %32 {approx = true} : vector<4x16x16xf32> -> vector<4x16x16xf32>
    %34 = vector.broadcast %0 : f32 to vector<4x16x16xf32>
    %35 = arith.mulf %34, %33 : vector<4x16x16xf32>
    %36 = vector.broadcast %1 : f32 to vector<4x16x16xf32>
    %37 = arith.subf %35, %36 : vector<4x16x16xf32>
    %38 = math.tanh %37 : vector<4x16x16xf32>
    %39 = vector.shape_cast %8 : vector<4x16xf32> to vector<4x16x1xf32>
    %40 = vector.broadcast %39 : vector<4x16x1xf32> to vector<4x16x16xf32>
    %41 = arith.mulf %40, %38 : vector<4x16x16xf32>
    %cst_14 = arith.constant dense<0.000000e+00> : vector<4x16xf32>
    %42 = vector.multi_reduction <add>, %41, %cst_14 [1] : vector<4x16x16xf32> to vector<4x16xf32>
    %43 = vector.broadcast %12 : vector<4x1xf32> to vector<4x16xf32>
    %44 = arith.addf %42, %43 : vector<4x16xf32>
    %45 = arith.subf %30, %44 : vector<4x16xf32>
    %cst_15 = arith.constant 0.000000e+00 : f32
    %46 = vector.broadcast %cst_15 : f32 to vector<4x16xf32>
    %47 = arith.maximumf %45, %46 : vector<4x16xf32>
    %48 = vector.broadcast %2 : f32 to vector<4x16xf32>
    %49 = arith.mulf %48, %47 : vector<4x16xf32>
    %50 = arith.mulf %47, %47 : vector<4x16xf32>
    %51 = vector.broadcast %3 : f32 to vector<4x16xf32>
    %52 = arith.mulf %51, %50 : vector<4x16xf32>
    %53 = arith.addf %49, %52 : vector<4x16xf32>
    %54 = arith.addf %53, %10 : vector<4x16xf32>
    %c0_16 = arith.constant 0 : index
    %c0_17 = arith.constant 0 : index
    %55 = vector.load %arg5[%c0_16, %c0_17] : memref<4x16xf32, #tpu.memory_space<vmem>>, vector<4x16xf32>
    tpu.vector_store %arg5[%c0_16, %c0_17], %54 {strides = array<i32>} : memref<4x16xf32, #tpu.memory_space<vmem>>, vector<4x16xf32>,
    return
  }
  func.func @transform_0(%arg0: i32) -> i32 {
    %c0_i32 = arith.constant 0 : i32
    %c0_i32_0 = arith.constant 0 : i32
    return %c0_i32 : i32
  }
  func.func @transform_1(%arg0: i32) -> (i32, i32, i32) {
    %c0_i32 = arith.constant 0 : i32
    %c0_i32_0 = arith.constant 0 : i32
    %c0_i32_1 = arith.constant 0 : i32
    return %arg0, %c0_i32, %c0_i32_0 : i32, i32, i32
  }
  func.func @transform_2(%arg0: i32) -> (i32, i32, i32) {
    %c0_i32 = arith.constant 0 : i32
    %c0_i32_0 = arith.constant 0 : i32
    %c0_i32_1 = arith.constant 0 : i32
    return %arg0, %c0_i32, %c0_i32_0 : i32, i32, i32
  }
  func.func @transform_3(%arg0: i32) -> (i32, i32, i32) {
    %c0_i32 = arith.constant 0 : i32
    %c0_i32_0 = arith.constant 0 : i32
    %c0_i32_1 = arith.constant 0 : i32
    return %arg0, %c0_i32, %c0_i32_0 : i32, i32, i32
  }
  func.func @transform_4(%arg0: i32) -> (i32, i32) {
    %c0_i32 = arith.constant 0 : i32
    %c0_i32_0 = arith.constant 0 : i32
    return %arg0, %c0_i32 : i32, i32
  }
}

</mosaic_0001>

<llo_original>
// kernel: tpu_custom_call.1
$region0: #{tpu_custom_call.1}
  #allocation0 [shape = 'u32[]', space=smem, size = 0x4, offset = 0x4, fixed_abs, tag = 'smem constant byte address 0x4 - core index']
  #allocation1 [shape = 'u32[144,128]{1,0:T(1,128)}', space=vmem, size = 0x12000, scoped, tag = 'internal scratch']
  %s0 = inlined_call_operand.vmem [shape: f32[4], index: 0, kind: input, shape index: {}]
  %s1 = inlined_call_operand.vmem [shape: f32[4,32,16], index: 1, kind: input, shape index: {}]
  %s2 = inlined_call_operand.vmem [shape: f32[4,16,32], index: 2, kind: input, shape index: {}]
  %s3 = inlined_call_operand.vmem [shape: f32[4,3,16], index: 3, kind: input, shape index: {}]
  %s4 = inlined_call_operand.hbm [shape: f32[4,16], index: 4, kind: output, shape index: {}]
  %s5 = sld [smem:[#allocation0]]
  $region30: #{tpu_custom_call.1} parent=0
    _
  %s7 = ssub.s32 1, %s5
  %s8 = scalar_select 0, %s7, %s5
  $region1: #{tpu_custom_call.1} parent=0
    #allocation2 [shape = 'u8[512]{0}', space=smem, size = 0x200, scoped, tag = 'input window, operand 0, single buffered']
    #allocation3 [shape = 's32[1]{0}', space=sflag, size = 0x4, scoped, tag = 'scoped memory for tpu_custom_call.1']
    #allocation4 [shape = 's32[1]{0}', space=sflag, size = 0x4, scoped, tag = 'scoped memory for tpu_custom_call.1']
    #allocation5 [shape = 'u8[2048]{0}', space=vmem, size = 0x800, scoped, tag = 'output window, operand 0, single buffered']
    %9 = vsyncpa [#allocation4], 0
    %10 = vsyncpa [#allocation3], 0
    // Predicated region
    $region2: #{tpu_custom_call.1} parent=1 // pred_check
      _
    $region3: #{tpu_custom_call.1} parent=1 // pred_check_branch
      %12 = sbr.rel (0) target = $region5
    $region4: #{tpu_custom_call.1} parent=1 // pred_region
      %s14 = ssub.s32 16, 16
      %15 = vsyncadd [#allocation4], %s14
      %s17 = sshll.u32 %s0, 4
      %s18 = int_to_ptr.vmem [resolvable:$true] %s17
      %20 = dma.vmem_to_smem %s18, 16, [#allocation2], [#allocation4]
    $region5: #{tpu_custom_call.1} parent=1 // pred_fallthru
      _
    // Predicated region
    $region6: #{tpu_custom_call.1} parent=1 // pred_check
      _
    $region7: #{tpu_custom_call.1} parent=1 // pred_check_branch
      %22 = sbr.rel (0) target = $region9
    $region8: #{tpu_custom_call.1} parent=1 // pred_region
      _
    $region9: #{tpu_custom_call.1} parent=1 // pred_fallthru
      _
    // Predicated region
    $region10: #{tpu_custom_call.1} parent=1 // pred_check
      _
    $region11: #{tpu_custom_call.1} parent=1 // pred_check_branch
      %24 = sbr.rel (0) target = $region13
    $region12: #{tpu_custom_call.1} parent=1 // pred_region
      _
    $region13: #{tpu_custom_call.1} parent=1 // pred_fallthru
      _
    // Predicated region
    $region14: #{tpu_custom_call.1} parent=1 // pred_check
      _
    $region15: #{tpu_custom_call.1} parent=1 // pred_check_branch
      %26 = sbr.rel (0) target = $region17
    $region16: #{tpu_custom_call.1} parent=1 // pred_region
      _
    $region17: #{tpu_custom_call.1} parent=1 // pred_fallthru
      _
    // Predicated region
    $region18: #{tpu_custom_call.1} parent=1 // pred_check
      _
    $region19: #{tpu_custom_call.1} parent=1 // pred_check_branch
      %28 = sbr.rel (0) target = $region21
    $region20: #{tpu_custom_call.1} parent=1 // pred_region
      %29 = dma.done [#allocation4], 16
    $region21: #{tpu_custom_call.1} parent=1 // pred_fallthru
      _
    %30 = sfence
    %s31 = sld [smem:[#allocation2]]
    %s32 = sld [smem:[#allocation2 + $0x1]]
    %s33 = sld [smem:[#allocation2 + $0x2]]
    %s34 = sld [smem:[#allocation2 + $0x3]]
    %v35 = vld [vmem:[%s1] sm:$0xff]
    %v36 = vld [vmem:[%s1 + $0x8] sm:$0xff]
    %v37 = vld [vmem:[%s1 + $0x10] sm:$0xff]
    %v38 = vld [vmem:[%s1 + $0x18] sm:$0xff]
    %v39 = vld [vmem:[%s1 + $0x20] sm:$0xff]
    %v40 = vld [vmem:[%s1 + $0x28] sm:$0xff]
    %v41 = vld [vmem:[%s1 + $0x30] sm:$0xff]
    %v42 = vld [vmem:[%s1 + $0x38] sm:$0xff]
    %v43 = vld [vmem:[%s1 + $0x40] sm:$0xff]
    %v44 = vld [vmem:[%s1 + $0x48] sm:$0xff]
    %v45 = vld [vmem:[%s1 + $0x50] sm:$0xff]
    %v46 = vld [vmem:[%s1 + $0x58] sm:$0xff]
    %v47 = vld [vmem:[%s1 + $0x60] sm:$0xff]
    %v48 = vld [vmem:[%s1 + $0x68] sm:$0xff]
    %v49 = vld [vmem:[%s1 + $0x70] sm:$0xff]
    %v50 = vld [vmem:[%s1 + $0x78] sm:$0xff]
    %v51 = vld [vmem:[%s2] sm:$0xff]
    %v52 = vld [vmem:[%s2 + $0x8] sm:$0xff]
    %v53 = vld [vmem:[%s2 + $0x10] sm:$0xff]
    %v54 = vld [vmem:[%s2 + $0x18] sm:$0xff]
    %v55 = vld [vmem:[%s2 + $0x20] sm:$0xff]
    %v56 = vld [vmem:[%s2 + $0x28] sm:$0xff]
    %v57 = vld [vmem:[%s2 + $0x30] sm:$0xff]
    %v58 = vld [vmem:[%s2 + $0x38] sm:$0xff]
    %v59 = vld [vmem:[%s3] sm:$0x7]
    %v60 = vld [vmem:[%s3 + $0x4] sm:$0x7]
    %v61 = vld [vmem:[%s3 + $0x8] sm:$0x7]
    %v62 = vld [vmem:[%s3 + $0xc] sm:$0x7]
    %v63 = vmul.f32 %v35, %v35
    %v64 = vmul.f32 %v36, %v36
    %v65 = vmul.f32 %v37, %v37
    %v66 = vmul.f32 %v38, %v38
    %v67 = vmul.f32 %v39, %v39
    %v68 = vmul.f32 %v40, %v40
    %v69 = vmul.f32 %v41, %v41
    %v70 = vmul.f32 %v42, %v42
    %v71 = vmul.f32 %v43, %v43
    %v72 = vmul.f32 %v44, %v44
    %v73 = vmul.f32 %v45, %v45
    %v74 = vmul.f32 %v46, %v46
    %v75 = vmul.f32 %v47, %v47
    %v76 = vmul.f32 %v48, %v48
    %v77 = vmul.f32 %v49, %v49
    %v78 = vmul.f32 %v50, %v50
    %vm79 = vcmask 130048
    %v80 = vsel %vm79, %v63, 0.0
    %v81 = vsel %vm79, %v64, 0.0
    %v82 = vadd.f32 %v80, %v81
    %v83 = vsel %vm79, %v65, 0.0
    %v84 = vadd.f32 %v82, %v83
    %v85 = vsel %vm79, %v66, 0.0
    %v86 = vadd.f32 %v84, %v85
    %v87 = vrot.slane %v86, 4
    %v88 = vadd.f32 %v86, %v87
    %v89 = vrot.slane %v88, 2
    %v90 = vadd.f32 %v88, %v89
    %v91 = vrot.slane %v90, 1
    %v92 = vadd.f32 %v90, %v91
    %v93 = vsel %vm79, %v67, 0.0
    %v94 = vsel %vm79, %v68, 0.0
    %v95 = vadd.f32 %v93, %v94
    %v96 = vsel %vm79, %v69, 0.0
    %v97 = vadd.f32 %v95, %v96
    %v98 = vsel %vm79, %v70, 0.0
    %v99 = vadd.f32 %v97, %v98
    %v100 = vrot.slane %v99, 4
    %v101 = vadd.f32 %v99, %v100
    %v102 = vrot.slane %v101, 2
    %v103 = vadd.f32 %v101, %v102
    %v104 = vrot.slane %v103, 1
    %v105 = vadd.f32 %v103, %v104
    %v106 = vsel %vm79, %v71, 0.0
    %v107 = vsel %vm79, %v72, 0.0
    %v108 = vadd.f32 %v106, %v107
    %v109 = vsel %vm79, %v73, 0.0
    %v110 = vadd.f32 %v108, %v109
    %v111 = vsel %vm79, %v74, 0.0
    %v112 = vadd.f32 %v110, %v111
    %v113 = vrot.slane %v112, 4
    %v114 = vadd.f32 %v112, %v113
    %v115 = vrot.slane %v114, 2
    %v116 = vadd.f32 %v114, %v115
    %v117 = vrot.slane %v116, 1
    %v118 = vadd.f32 %v116, %v117
    %v119 = vsel %vm79, %v75, 0.0
    %v120 = vsel %vm79, %v76, 0.0
    %v121 = vadd.f32 %v119, %v120
    %v122 = vsel %vm79, %v77, 0.0
    %v123 = vadd.f32 %v121, %v122
    %v124 = vsel %vm79, %v78, 0.0
    %v125 = vadd.f32 %v123, %v124
    %v126 = vrot.slane %v125, 4
    %v127 = vadd.f32 %v125, %v126
    %v128 = vrot.slane %v127, 2
    %v129 = vadd.f32 %v127, %v128
    %v130 = vrot.slane %v129, 1
    %v131 = vadd.f32 %v129, %v130
    %v132 = vmul.f32 %v51, %v51
    %v133 = vmul.f32 %v52, %v52
    %v134 = vmul.f32 %v53, %v53
    %v135 = vmul.f32 %v54, %v54
    %v136 = vmul.f32 %v55, %v55
    %v137 = vmul.f32 %v56, %v56
    %v138 = vmul.f32 %v57, %v57
    %v139 = vmul.f32 %v58, %v58
    %vm140 = vcmask 261120
    %v141 = vsel %vm140, %v132, 0.0
    %142 = vadd.xlane.f32.xlu0 %v141
    %v143 = vpop.xlane.xlu0 %142
    %v144 = vsel %vm140, %v133, 0.0
    %145 = vadd.xlane.f32.xlu0 %v144
    %v146 = vpop.xlane.xlu0 %145
    %v147 = vsel %vm140, %v134, 0.0
    %148 = vadd.xlane.f32.xlu0 %v147
    %v149 = vpop.xlane.xlu0 %148
    %v150 = vsel %vm140, %v135, 0.0
    %151 = vadd.xlane.f32.xlu0 %v150
    %v152 = vpop.xlane.xlu0 %151
    %v153 = vsel %vm140, %v136, 0.0
    %154 = vadd.xlane.f32.xlu0 %v153
    %v155 = vpop.xlane.xlu0 %154
    %v156 = vsel %vm140, %v137, 0.0
    %157 = vadd.xlane.f32.xlu0 %v156
    %v158 = vpop.xlane.xlu0 %157
    %v159 = vsel %vm140, %v138, 0.0
    %160 = vadd.xlane.f32.xlu0 %v159
    %v161 = vpop.xlane.xlu0 %160
    %v162 = vsel %vm140, %v139, 0.0
    %163 = vadd.xlane.f32.xlu0 %v162
    %v164 = vpop.xlane.xlu0 %163
    %v166 = vsel %vm140, %v51, 0
    %v169 = vsel %vm140, %v52, 0
    %171 = vmatprep.subr.mxu0 0.0
    %v172 = vand.u32 %v35, 4294901760
    %173 = vmatpush1.msra.mxu0 %v172
    %174 = vmatprep.subr.mxu0 0.0
    %v175 = vand.u32 %v36, 4294901760
    %176 = vmatpush1.msra.mxu0 %v175
    %177 = vmatprep.subr.mxu0 0.0
    %v178 = vand.u32 %v37, 4294901760
    %179 = vmatpush1.msra.mxu0 %v178
    %180 = vmatprep.subr.mxu0 0.0
    %v181 = vand.u32 %v38, 4294901760
    %182 = vmatpush1.msra.mxu0 %v181
    %183 = vmatprep.subr.mxu0 0.0
    %184 = vmatpush1.msra.mxu0 0.0
    %185 = vmatprep.subr.mxu0 0.0
    %186 = vmatpush1.msra.mxu0 0.0
    %187 = vmatprep.subr.mxu0 0.0
    %188 = vmatpush1.msra.mxu0 0.0
    %189 = vmatprep.subr.mxu0 0.0
    %190 = vmatpush1.msra.mxu0 0.0
    %191 = vmatprep.subr.mxu0 0.0
    %192 = vmatpush1.msra.mxu0 0.0
    %193 = vmatprep.subr.mxu0 0.0
    %194 = vmatpush1.msra.mxu0 0.0
    %195 = vmatprep.subr.mxu0 0.0
    %196 = vmatpush1.msra.mxu0 0.0
    %197 = vmatprep.subr.mxu0 0.0
    %198 = vmatpush1.msra.mxu0 0.0
    %199 = vmatprep.subr.mxu0 0.0
    %200 = vmatpush1.msra.mxu0 0.0
    %201 = vmatprep.subr.mxu0 0.0
    %202 = vmatpush1.msra.mxu0 0.0
    %203 = vmatprep.subr.mxu0 0.0
    %204 = vmatpush1.msra.mxu0 0.0
    %205 = vmatprep.subr.mxu0 0.0
    %206 = vmatpush1.msra.mxu0 0.0
    %207 = vmatprep.subr.mxu0 0.0
    %208 = vmatpush1.msra.mxu0 0.0
    %209 = vmatprep.subr.mxu0 0.0
    %210 = vmatpush1.msra.mxu0 0.0
    %211 = vmatprep.subr.mxu0 0.0
    %212 = vmatpush1.msra.mxu0 0.0
    %213 = vmatprep.subr.mxu0 0.0
    %214 = vmatpush1.msra.mxu0 0.0
    %215 = vmatprep.subr.mxu0 0.0
    %216 = vmatpush1.msra.mxu0 0.0
    %217 = vmatprep.subr.mxu0 0.0
    %218 = vmatpush1.msra.mxu0 0.0
    %219 = vmatprep.subr.mxu0 0.0
    %220 = vmatpush1.msra.mxu0 0.0
    %221 = vmatprep.subr.mxu0 0.0
    %222 = vmatpush1.msra.mxu0 0.0
    %223 = vmatprep.subr.mxu0 0.0
    %224 = vmatpush1.msra.mxu0 0.0
    %225 = vmatprep.subr.mxu0 0.0
    %226 = vmatpush1.msra.mxu0 0.0
    %227 = vmatprep.subr.mxu0 0.0
    %228 = vmatpush1.msra.mxu0 0.0
    %229 = vmatprep.subr.mxu0 0.0
    %230 = vmatpush1.msra.mxu0 0.0
    %231 = vmatprep.subr.mxu0 0.0
    %232 = vmatpush1.msra.mxu0 0.0
    %233 = vmatprep.subr.mxu0 0.0
    %234 = vmatpush1.msra.mxu0 0.0
    %235 = vmatprep.subr.mxu0 0.0
    %236 = vmatpush1.msra.mxu0 0.0
    %237 = vmatprep.subr.mxu0 0.0
    %238 = vmatpush1.msra.mxu0 0.0
    %239 = vmatprep.mubr.f32.mxu0 0.0
    %v240 = vand.u32 %v166, 4294901760
    %v241 = vsub.f32 %v166, %v240
    %v242 = vand.u32 %v241, 4294901760
    %v243 = vsub.f32 %v241, %v242
    %v244 = vand.u32 %v243, 4294901760
    %245 = vmatmul.mubr.f32.gmra.mrb[0].mxu0 %v244
    %v246 = vpop.f32.mrb[0].mxu0
    %v247 = vadd.f32 0.0, %v246
    %v248 = vpop.f32.mrb[0].mxu0
    %249 = vmatprep.mubr.f32.mxu0 0.0
    %v250 = vand.u32 %v169, 4294901760
    %v251 = vsub.f32 %v169, %v250
    %v252 = vand.u32 %v251, 4294901760
    %v253 = vsub.f32 %v251, %v252
    %v254 = vand.u32 %v253, 4294901760
    %255 = vmatmul.mubr.f32.gmra.mrb[0].mxu0 %v254
    %v256 = vpop.f32.mrb[0].mxu0
    %v257 = vadd.f32 0.0, %v256
    %v258 = vpop.f32.mrb[0].mxu0
    %259 = vdwg.mxu0
    %260 = vmatprep.subr.mxu0 0.0
    %v261 = vand.u32 %v35, 4294901760
    %v262 = vsub.f32 %v35, %v261
    %v263 = vand.u32 %v262, 4294901760
    %v264 = vsub.f32 %v262, %v263
    %v265 = vand.u32 %v264, 4294901760
    %266 = vmatpush1.msra.mxu0 %v265
    %267 = vmatprep.subr.mxu0 0.0
    %v268 = vand.u32 %v36, 4294901760
    %v269 = vsub.f32 %v36, %v268
    %v270 = vand.u32 %v269, 4294901760
    %v271 = vsub.f32 %v269, %v270
    %v272 = vand.u32 %v271, 4294901760
    %273 = vmatpush1.msra.mxu0 %v272
    %274 = vmatprep.subr.mxu0 0.0
    %v275 = vand.u32 %v37, 4294901760
    %v276 = vsub.f32 %v37, %v275
    %v277 = vand.u32 %v276, 4294901760
    %v278 = vsub.f32 %v276, %v277
    %v279 = vand.u32 %v278, 4294901760
    %280 = vmatpush1.msra.mxu0 %v279
    %281 = vmatprep.subr.mxu0 0.0
    %v282 = vand.u32 %v38, 4294901760
    %v283 = vsub.f32 %v38, %v282
    %v284 = vand.u32 %v283, 4294901760
    %v285 = vsub.f32 %v283, %v284
    %v286 = vand.u32 %v285, 4294901760
    %287 = vmatpush1.msra.mxu0 %v286
    %288 = vmatprep.subr.mxu0 0.0
    %289 = vmatpush1.msra.mxu0 0.0
    %290 = vmatprep.subr.mxu0 0.0
    %291 = vmatpush1.msra.mxu0 0.0
    %292 = vmatprep.subr.mxu0 0.0
    %293 = vmatpush1.msra.mxu0 0.0
    %294 = vmatprep.subr.mxu0 0.0
    %295 = vmatpush1.msra.mxu0 0.0
    %296 = vmatprep.subr.mxu0 0.0
    %297 = vmatpush1.msra.mxu0 0.0
    %298 = vmatprep.subr.mxu0 0.0
    %299 = vmatpush1.msra.mxu0 0.0
    %300 = vmatprep.subr.mxu0 0.0
    %301 = vmatpush1.msra.mxu0 0.0
    %302 = vmatprep.subr.mxu0 0.0
    %303 = vmatpush1.msra.mxu0 0.0
    %304 = vmatprep.subr.mxu0 0.0
    %305 = vmatpush1.msra.mxu0 0.0
    %306 = vmatprep.subr.mxu0 0.0
    %307 = vmatpush1.msra.mxu0 0.0
    %308 = vmatprep.subr.mxu0 0.0
    %309 = vmatpush1.msra.mxu0 0.0
    %310 = vmatprep.subr.mxu0 0.0
    %311 = vmatpush1.msra.mxu0 0.0
    %312 = vmatprep.subr.mxu0 0.0
    %313 = vmatpush1.msra.mxu0 0.0
    %314 = vmatprep.subr.mxu0 0.0
    %315 = vmatpush1.msra.mxu0 0.0
    %316 = vmatprep.subr.mxu0 0.0
    %317 = vmatpush1.msra.mxu0 0.0
    %318 = vmatprep.subr.mxu0 0.0
    %319 = vmatpush1.msra.mxu0 0.0
    %320 = vmatprep.subr.mxu0 0.0
    %321 = vmatpush1.msra.mxu0 0.0
    %322 = vmatprep.subr.mxu0 0.0
    %323 = vmatpush1.msra.mxu0 0.0
    %324 = vmatprep.subr.mxu0 0.0
    %325 = vmatpush1.msra.mxu0 0.0
    %326 = vmatprep.subr.mxu0 0.0
    %327 = vmatpush1.msra.mxu0 0.0
    %328 = vmatprep.subr.mxu0 0.0
    %329 = vmatpush1.msra.mxu0 0.0
    %330 = vmatprep.subr.mxu0 0.0
    %331 = vmatpush1.msra.mxu0 0.0
    %332 = vmatprep.subr.mxu0 0.0
    %333 = vmatpush1.msra.mxu0 0.0
    %334 = vmatprep.subr.mxu0 0.0
    %335 = vmatpush1.msra.mxu0 0.0
    %336 = vmatprep.subr.mxu0 0.0
    %337 = vmatpush1.msra.mxu0 0.0
    %338 = vmatprep.subr.mxu0 0.0
    %339 = vmatpush1.msra.mxu0 0.0
    %340 = vmatprep.subr.mxu0 0.0
    %341 = vmatpush1.msra.mxu0 0.0
    %342 = vmatprep.subr.mxu0 0.0
    %343 = vmatpush1.msra.mxu0 0.0
    %344 = vmatprep.mubr.f32.mxu0 0.0
    %v345 = vand.u32 %v166, 4294901760
    %346 = vmatmul.mubr.f32.gmra.mrb[0].mxu0 %v345
    %v347 = vpop.f32.mrb[0].mxu0
    %v348 = vadd.f32 %v247, %v347
    %v349 = vpop.f32.mrb[0].mxu0
    %350 = vmatprep.mubr.f32.mxu0 0.0
    %v351 = vand.u32 %v169, 4294901760
    %352 = vmatmul.mubr.f32.gmra.mrb[0].mxu0 %v351
    %v353 = vpop.f32.mrb[0].mxu0
    %v354 = vadd.f32 %v257, %v353
    %v355 = vpop.f32.mrb[0].mxu0
    %356 = vdwg.mxu0
    %357 = vmatprep.subr.mxu0 0.0
    %v358 = vand.u32 %v35, 4294901760
    %v359 = vsub.f32 %v35, %v358
    %360 = vmatpush1.msra.mxu0 %v359
    %361 = vmatprep.subr.mxu0 0.0
    %v362 = vand.u32 %v36, 4294901760
    %v363 = vsub.f32 %v36, %v362
    %364 = vmatpush1.msra.mxu0 %v363
    %365 = vmatprep.subr.mxu0 0.0
    %v366 = vand.u32 %v37, 4294901760
    %v367 = vsub.f32 %v37, %v366
    %368 = vmatpush1.msra.mxu0 %v367
    %369 = vmatprep.subr.mxu0 0.0
    %v370 = vand.u32 %v38, 4294901760
    %v371 = vsub.f32 %v38, %v370
    %372 = vmatpush1.msra.mxu0 %v371
    %373 = vmatprep.subr.mxu0 0.0
    %374 = vmatpush1.msra.mxu0 0.0
    %375 = vmatprep.subr.mxu0 0.0
    %376 = vmatpush1.msra.mxu0 0.0
    %377 = vmatprep.subr.mxu0 0.0
    %378 = vmatpush1.msra.mxu0 0.0
    %379 = vmatprep.subr.mxu0 0.0
    %380 = vmatpush1.msra.mxu0 0.0
    %381 = vmatprep.subr.mxu0 0.0
    %382 = vmatpush1.msra.mxu0 0.0
    %383 = vmatprep.subr.mxu0 0.0
    %384 = vmatpush1.msra.mxu0 0.0
    %385 = vmatprep.subr.mxu0 0.0
    %386 = vmatpush1.msra.mxu0 0.0
    %387 = vmatprep.subr.mxu0 0.0
    %388 = vmatpush1.msra.mxu0 0.0
    %389 = vmatprep.subr.mxu0 0.0
    %390 = vmatpush1.msra.mxu0 0.0
    %391 = vmatprep.subr.mxu0 0.0
    %392 = vmatpush1.msra.mxu0 0.0
    %393 = vmatprep.subr.mxu0 0.0
    %394 = vmatpush1.msra.mxu0 0.0
    %395 = vmatprep.subr.mxu0 0.0
    %396 = vmatpush1.msra.mxu0 0.0
    %397 = vmatprep.subr.mxu0 0.0
    %398 = vmatpush1.msra.mxu0 0.0
    %399 = vmatprep.subr.mxu0 0.0
    %400 = vmatpush1.msra.mxu0 0.0
    %401 = vmatprep.subr.mxu0 0.0
    %402 = vmatpush1.msra.mxu0 0.0
    %403 = vmatprep.subr.mxu0 0.0
    %404 = vmatpush1.msra.mxu0 0.0
    %405 = vmatprep.subr.mxu0 0.0
    %406 = vmatpush1.msra.mxu0 0.0
    %407 = vmatprep.subr.mxu0 0.0
    %408 = vmatpush1.msra.mxu0 0.0
    %409 = vmatprep.subr.mxu0 0.0
    %410 = vmatpush1.msra.mxu0 0.0
    %411 = vmatprep.subr.mxu0 0.0
    %412 = vmatpush1.msra.mxu0 0.0
    %413 = vmatprep.subr.mxu0 0.0
    %414 = vmatpush1.msra.mxu0 0.0
    %415 = vmatprep.subr.mxu0 0.0
    %416 = vmatpush1.msra.mxu0 0.0
    %417 = vmatprep.subr.mxu0 0.0
    %418 = vmatpush1.msra.mxu0 0.0
    %419 = vmatprep.subr.mxu0 0.0
    %420 = vmatpush1.msra.mxu0 0.0
    %421 = vmatprep.subr.mxu0 0.0
    %422 = vmatpush1.msra.mxu0 0.0
    %423 = vmatprep.subr.mxu0 0.0
    %424 = vmatpush1.msra.mxu0 0.0
    %425 = vmatprep.subr.mxu0 0.0
    %426 = vmatpush1.msra.mxu0 0.0
    %427 = vmatprep.subr.mxu0 0.0
    %428 = vmatpush1.msra.mxu0 0.0
    %429 = vmatprep.mubr.f32.mxu0 0.0
    %v430 = vand.u32 %v166, 4294901760
    %v431 = vsub.f32 %v166, %v430
    %432 = vmatmul.mubr.f32.gmra.mrb[0].mxu0 %v431
    %v433 = vpop.f32.mrb[0].mxu0
    %v434 = vadd.f32 %v348, %v433
    %v435 = vpop.f32.mrb[0].mxu0
    %436 = vmatprep.mubr.f32.mxu0 0.0
    %v437 = vand.u32 %v169, 4294901760
    %v438 = vsub.f32 %v169, %v437
    %439 = vmatmul.mubr.f32.gmra.mrb[0].mxu0 %v438
    %v440 = vpop.f32.mrb[0].mxu0
    %v441 = vadd.f32 %v354, %v440
    %v442 = vpop.f32.mrb[0].mxu0
    %443 = vdwg.mxu0
    %444 = vmatprep.subr.mxu0 0.0
    %v445 = vand.u32 %v35, 4294901760
    %446 = vmatpush1.msra.mxu0 %v445
    %447 = vmatprep.subr.mxu0 0.0
    %v448 = vand.u32 %v36, 4294901760
    %449 = vmatpush1.msra.mxu0 %v448
    %450 = vmatprep.subr.mxu0 0.0
    %v451 = vand.u32 %v37, 4294901760
    %452 = vmatpush1.msra.mxu0 %v451
    %453 = vmatprep.subr.mxu0 0.0
    %v454 = vand.u32 %v38, 4294901760
    %455 = vmatpush1.msra.mxu0 %v454
    %456 = vmatprep.subr.mxu0 0.0
    %457 = vmatpush1.msra.mxu0 0.0
    %458 = vmatprep.subr.mxu0 0.0
    %459 = vmatpush1.msra.mxu0 0.0
    %460 = vmatprep.subr.mxu0 0.0
    %461 = vmatpush1.msra.mxu0 0.0
    %462 = vmatprep.subr.mxu0 0.0
    %463 = vmatpush1.msra.mxu0 0.0
    %464 = vmatprep.subr.mxu0 0.0
    %465 = vmatpush1.msra.mxu0 0.0
    %466 = vmatprep.subr.mxu0 0.0
    %467 = vmatpush1.msra.mxu0 0.0
    %468 = vmatprep.subr.mxu0 0.0
    %469 = vmatpush1.msra.mxu0 0.0
    %470 = vmatprep.subr.mxu0 0.0
    %471 = vmatpush1.msra.mxu0 0.0
    %472 = vmatprep.subr.mxu0 0.0
    %473 = vmatpush1.msra.mxu0 0.0
    %474 = vmatprep.subr.mxu0 0.0
    %475 = vmatpush1.msra.mxu0 0.0
    %476 = vmatprep.subr.mxu0 0.0
    %477 = vmatpush1.msra.mxu0 0.0
    %478 = vmatprep.subr.mxu0 0.0
    %479 = vmatpush1.msra.mxu0 0.0
    %480 = vmatprep.subr.mxu0 0.0
    %481 = vmatpush1.msra.mxu0 0.0
    %482 = vmatprep.subr.mxu0 0.0
    %483 = vmatpush1.msra.mxu0 0.0
    %484 = vmatprep.subr.mxu0 0.0
    %485 = vmatpush1.msra.mxu0 0.0
    %486 = vmatprep.subr.mxu0 0.0
    %487 = vmatpush1.msra.mxu0 0.0
    %488 = vmatprep.subr.mxu0 0.0
    %489 = vmatpush1.msra.mxu0 0.0
    %490 = vmatprep.subr.mxu0 0.0
    %491 = vmatpush1.msra.mxu0 0.0
    %492 = vmatprep.subr.mxu0 0.0
    %493 = vmatpush1.msra.mxu0 0.0
    %494 = vmatprep.subr.mxu0 0.0
    %495 = vmatpush1.msra.mxu0 0.0
    %496 = vmatprep.subr.mxu0 0.0
    %497 = vmatpush1.msra.mxu0 0.0
    %498 = vmatprep.subr.mxu0 0.0
    %499 = vmatpush1.msra.mxu0 0.0
    %500 = vmatprep.subr.mxu0 0.0
    %501 = vmatpush1.msra.mxu0 0.0
    %502 = vmatprep.subr.mxu0 0.0
    %503 = vmatpush1.msra.mxu0 0.0
    %504 = vmatprep.subr.mxu0 0.0
    %505 = vmatpush1.msra.mxu0 0.0
    %506 = vmatprep.subr.mxu0 0.0
    %507 = vmatpush1.msra.mxu0 0.0
    %508 = vmatprep.subr.mxu0 0.0
    %509 = vmatpush1.msra.mxu0 0.0
    %510 = vmatprep.subr.mxu0 0.0
    %511 = vmatpush1.msra.mxu0 0.0
    %512 = vmatprep.mubr.f32.mxu0 0.0
    %v513 = vand.u32 %v166, 4294901760
    %v514 = vsub.f32 %v166, %v513
    %v515 = vand.u32 %v514, 4294901760
    %516 = vmatmul.mubr.f32.gmra.mrb[0].mxu0 %v515
    %v517 = vpop.f32.mrb[0].mxu0
    %v518 = vadd.f32 %v434, %v517
    %v519 = vpop.f32.mrb[0].mxu0
    %520 = vmatprep.mubr.f32.mxu0 0.0
    %v521 = vand.u32 %v169, 4294901760
    %v522 = vsub.f32 %v169, %v521
    %v523 = vand.u32 %v522, 4294901760
    %524 = vmatmul.mubr.f32.gmra.mrb[0].mxu0 %v523
    %v525 = vpop.f32.mrb[0].mxu0
    %v526 = vadd.f32 %v441, %v525
    %v527 = vpop.f32.mrb[0].mxu0
    %528 = vdwg.mxu0
    %529 = vmatprep.subr.mxu0 0.0
    %v530 = vand.u32 %v35, 4294901760
    %v531 = vsub.f32 %v35, %v530
    %v532 = vand.u32 %v531, 4294901760
    %533 = vmatpush1.msra.mxu0 %v532
    %534 = vmatprep.subr.mxu0 0.0
    %v535 = vand.u32 %v36, 4294901760
    %v536 = vsub.f32 %v36, %v535
    %v537 = vand.u32 %v536, 4294901760
    %538 = vmatpush1.msra.mxu0 %v537
    %539 = vmatprep.subr.mxu0 0.0
    %v540 = vand.u32 %v37, 4294901760
    %v541 = vsub.f32 %v37, %v540
    %v542 = vand.u32 %v541, 4294901760
    %543 = vmatpush1.msra.mxu0 %v542
    %544 = vmatprep.subr.mxu0 0.0
    %v545 = vand.u32 %v38, 4294901760
    %v546 = vsub.f32 %v38, %v545
    %v547 = vand.u32 %v546, 4294901760
    %548 = vmatpush1.msra.mxu0 %v547
    %549 = vmatprep.subr.mxu0 0.0
    %550 = vmatpush1.msra.mxu0 0.0
    %551 = vmatprep.subr.mxu0 0.0
    %552 = vmatpush1.msra.mxu0 0.0
    %553 = vmatprep.subr.mxu0 0.0
    %554 = vmatpush1.msra.mxu0 0.0
    %555 = vmatprep.subr.mxu0 0.0
    %556 = vmatpush1.msra.mxu0 0.0
    %557 = vmatprep.subr.mxu0 0.0
    %558 = vmatpush1.msra.mxu0 0.0
    %559 = vmatprep.subr.mxu0 0.0
    %560 = vmatpush1.msra.mxu0 0.0
    %561 = vmatprep.subr.mxu0 0.0
    %562 = vmatpush1.msra.mxu0 0.0
    %563 = vmatprep.subr.mxu0 0.0
    %564 = vmatpush1.msra.mxu0 0.0
    %565 = vmatprep.subr.mxu0 0.0
    %566 = vmatpush1.msra.mxu0 0.0
    %567 = vmatprep.subr.mxu0 0.0
    %568 = vmatpush1.msra.mxu0 0.0
    %569 = vmatprep.subr.mxu0 0.0
    %570 = vmatpush1.msra.mxu0 0.0
    %571 = vmatprep.subr.mxu0 0.0
    %572 = vmatpush1.msra.mxu0 0.0
    %573 = vmatprep.subr.mxu0 0.0
    %574 = vmatpush1.msra.mxu0 0.0
    %575 = vmatprep.subr.mxu0 0.0
    %576 = vmatpush1.msra.mxu0 0.0
    %577 = vmatprep.subr.mxu0 0.0
    %578 = vmatpush1.msra.mxu0 0.0
    %579 = vmatprep.subr.mxu0 0.0
    %580 = vmatpush1.msra.mxu0 0.0
    %581 = vmatprep.subr.mxu0 0.0
    %582 = vmatpush1.msra.mxu0 0.0
    %583 = vmatprep.subr.mxu0 0.0
    %584 = vmatpush1.msra.mxu0 0.0
    %585 = vmatprep.subr.mxu0 0.0
    %586 = vmatpush1.msra.mxu0 0.0
    %587 = vmatprep.subr.mxu0 0.0
    %588 = vmatpush1.msra.mxu0 0.0
    %589 = vmatprep.subr.mxu0 0.0
    %590 = vmatpush1.msra.mxu0 0.0
    %591 = vmatprep.subr.mxu0 0.0
    %592 = vmatpush1.msra.mxu0 0.0
    %593 = vmatprep.subr.mxu0 0.0
    %594 = vmatpush1.msra.mxu0 0.0
    %595 = vmatprep.subr.mxu0 0.0
    %596 = vmatpush1.msra.mxu0 0.0
    %597 = vmatprep.subr.mxu0 0.0
    %598 = vmatpush1.msra.mxu0 0.0
    %599 = vmatprep.subr.mxu0 0.0
    %600 = vmatpush1.msra.mxu0 0.0
    %601 = vmatprep.subr.mxu0 0.0
    %602 = vmatpush1.msra.mxu0 0.0
    %603 = vmatprep.subr.mxu0 0.0
    %604 = vmatpush1.msra.mxu0 0.0
    %605 = vmatprep.mubr.f32.mxu0 0.0
    %v606 = vand.u32 %v166, 4294901760
    %607 = vmatmul.mubr.f32.gmra.mrb[0].mxu0 %v606
    %v608 = vpop.f32.mrb[0].mxu0
    %v609 = vadd.f32 %v518, %v608
    %v610 = vpop.f32.mrb[0].mxu0
    %611 = vmatprep.mubr.f32.mxu0 0.0
    %v612 = vand.u32 %v169, 4294901760
    %613 = vmatmul.mubr.f32.gmra.mrb[0].mxu0 %v612
    %v614 = vpop.f32.mrb[0].mxu0
    %v615 = vadd.f32 %v526, %v614
    %v616 = vpop.f32.mrb[0].mxu0
    %617 = vdwg.mxu0
    %618 = vmatprep.subr.mxu0 0.0
    %v619 = vand.u32 %v35, 4294901760
    %620 = vmatpush1.msra.mxu0 %v619
    %621 = vmatprep.subr.mxu0 0.0
    %v622 = vand.u32 %v36, 4294901760
    %623 = vmatpush1.msra.mxu0 %v622
    %624 = vmatprep.subr.mxu0 0.0
    %v625 = vand.u32 %v37, 4294901760
    %626 = vmatpush1.msra.mxu0 %v625
    %627 = vmatprep.subr.mxu0 0.0
    %v628 = vand.u32 %v38, 4294901760
    %629 = vmatpush1.msra.mxu0 %v628
    %630 = vmatprep.subr.mxu0 0.0
    %631 = vmatpush1.msra.mxu0 0.0
    %632 = vmatprep.subr.mxu0 0.0
    %633 = vmatpush1.msra.mxu0 0.0
    %634 = vmatprep.subr.mxu0 0.0
    %635 = vmatpush1.msra.mxu0 0.0
    %636 = vmatprep.subr.mxu0 0.0
    %637 = vmatpush1.msra.mxu0 0.0
    %638 = vmatprep.subr.mxu0 0.0
    %639 = vmatpush1.msra.mxu0 0.0
    %640 = vmatprep.subr.mxu0 0.0
    %641 = vmatpush1.msra.mxu0 0.0
    %642 = vmatprep.subr.mxu0 0.0
    %643 = vmatpush1.msra.mxu0 0.0
    %644 = vmatprep.subr.mxu0 0.0
    %645 = vmatpush1.msra.mxu0 0.0
    %646 = vmatprep.subr.mxu0 0.0
    %647 = vmatpush1.msra.mxu0 0.0
    %648 = vmatprep.subr.mxu0 0.0
    %649 = vmatpush1.msra.mxu0 0.0
    %650 = vmatprep.subr.mxu0 0.0
    %651 = vmatpush1.msra.mxu0 0.0
    %652 = vmatprep.subr.mxu0 0.0
    %653 = vmatpush1.msra.mxu0 0.0
    %654 = vmatprep.subr.mxu0 0.0
    %655 = vmatpush1.msra.mxu0 0.0
    %656 = vmatprep.subr.mxu0 0.0
    %657 = vmatpush1.msra.mxu0 0.0
    %658 = vmatprep.subr.mxu0 0.0
    %659 = vmatpush1.msra.mxu0 0.0
    %660 = vmatprep.subr.mxu0 0.0
    %661 = vmatpush1.msra.mxu0 0.0
    %662 = vmatprep.subr.mxu0 0.0
    %663 = vmatpush1.msra.mxu0 0.0
    %664 = vmatprep.subr.mxu0 0.0
    %665 = vmatpush1.msra.mxu0 0.0
    %666 = vmatprep.subr.mxu0 0.0
    %667 = vmatpush1.msra.mxu0 0.0
    %668 = vmatprep.subr.mxu0 0.0
    %669 = vmatpush1.msra.mxu0 0.0
    %670 = vmatprep.subr.mxu0 0.0
    %671 = vmatpush1.msra.mxu0 0.0
    %672 = vmatprep.subr.mxu0 0.0
    %673 = vmatpush1.msra.mxu0 0.0
    %674 = vmatprep.subr.mxu0 0.0
    %675 = vmatpush1.msra.mxu0 0.0
    %676 = vmatprep.subr.mxu0 0.0
    %677 = vmatpush1.msra.mxu0 0.0
    %678 = vmatprep.subr.mxu0 0.0
    %679 = vmatpush1.msra.mxu0 0.0
    %680 = vmatprep.subr.mxu0 0.0
    %681 = vmatpush1.msra.mxu0 0.0
    %682 = vmatprep.subr.mxu0 0.0
    %683 = vmatpush1.msra.mxu0 0.0
    %684 = vmatprep.subr.mxu0 0.0
    %685 = vmatpush1.msra.mxu0 0.0
    %686 = vmatprep.mubr.f32.mxu0 0.0
    %v687 = vand.u32 %v166, 4294901760
    %688 = vmatmul.mubr.f32.gmra.mrb[0].mxu0 %v687
    %v689 = vpop.f32.mrb[0].mxu0
    %v690 = vadd.f32 %v609, %v689
    %v691 = vpop.f32.mrb[0].mxu0
    %692 = vmatprep.mubr.f32.mxu0 0.0
    %v693 = vand.u32 %v169, 4294901760
    %694 = vmatmul.mubr.f32.gmra.mrb[0].mxu0 %v693
    %v695 = vpop.f32.mrb[0].mxu0
    %v696 = vadd.f32 %v615, %v695
    %v697 = vpop.f32.mrb[0].mxu0
    %698 = vdwg.mxu0
    %v700 = vsel %vm140, %v53, 0
    %v703 = vsel %vm140, %v54, 0
    %705 = vmatprep.subr.mxu0 0.0
    %v706 = vand.u32 %v39, 4294901760
    %707 = vmatpush1.msra.mxu0 %v706
    %708 = vmatprep.subr.mxu0 0.0
    %v709 = vand.u32 %v40, 4294901760
    %710 = vmatpush1.msra.mxu0 %v709
    %711 = vmatprep.subr.mxu0 0.0
    %v712 = vand.u32 %v41, 4294901760
    %713 = vmatpush1.msra.mxu0 %v712
    %714 = vmatprep.subr.mxu0 0.0
    %v715 = vand.u32 %v42, 4294901760
    %716 = vmatpush1.msra.mxu0 %v715
    %717 = vmatprep.subr.mxu0 0.0
    %718 = vmatpush1.msra.mxu0 0.0
    %719 = vmatprep.subr.mxu0 0.0
    %720 = vmatpush1.msra.mxu0 0.0
    %721 = vmatprep.subr.mxu0 0.0
    %722 = vmatpush1.msra.mxu0 0.0
    %723 = vmatprep.subr.mxu0 0.0
    %724 = vmatpush1.msra.mxu0 0.0
    %725 = vmatprep.subr.mxu0 0.0
    %726 = vmatpush1.msra.mxu0 0.0
    %727 = vmatprep.subr.mxu0 0.0
    %728 = vmatpush1.msra.mxu0 0.0
    %729 = vmatprep.subr.mxu0 0.0
    %730 = vmatpush1.msra.mxu0 0.0
    %731 = vmatprep.subr.mxu0 0.0
    %732 = vmatpush1.msra.mxu0 0.0
    %733 = vmatprep.subr.mxu0 0.0
    %734 = vmatpush1.msra.mxu0 0.0
    %735 = vmatprep.subr.mxu0 0.0
    %736 = vmatpush1.msra.mxu0 0.0
    %737 = vmatprep.subr.mxu0 0.0
    %738 = vmatpush1.msra.mxu0 0.0
    %739 = vmatprep.subr.mxu0 0.0
    %740 = vmatpush1.msra.mxu0 0.0
    %741 = vmatprep.subr.mxu0 0.0
    %742 = vmatpush1.msra.mxu0 0.0
    %743 = vmatprep.subr.mxu0 0.0
    %744 = vmatpush1.msra.mxu0 0.0
    %745 = vmatprep.subr.mxu0 0.0
    %746 = vmatpush1.msra.mxu0 0.0
    %747 = vmatprep.subr.mxu0 0.0
    %748 = vmatpush1.msra.mxu0 0.0
    %749 = vmatprep.subr.mxu0 0.0
    %750 = vmatpush1.msra.mxu0 0.0
    %751 = vmatprep.subr.mxu0 0.0
    %752 = vmatpush1.msra.mxu0 0.0
    %753 = vmatprep.subr.mxu0 0.0
    %754 = vmatpush1.msra.mxu0 0.0
    %755 = vmatprep.subr.mxu0 0.0
    %756 = vmatpush1.msra.mxu0 0.0
    %757 = vmatprep.subr.mxu0 0.0
    %758 = vmatpush1.msra.mxu0 0.0
    %759 = vmatprep.subr.mxu0 0.0
    %760 = vmatpush1.msra.mxu0 0.0
    %761 = vmatprep.subr.mxu0 0.0
    %762 = vmatpush1.msra.mxu0 0.0
    %763 = vmatprep.subr.mxu0 0.0
    %764 = vmatpush1.msra.mxu0 0.0
    %765 = vmatprep.subr.mxu0 0.0
    %766 = vmatpush1.msra.mxu0 0.0
    %767 = vmatprep.subr.mxu0 0.0
    %768 = vmatpush1.msra.mxu0 0.0
    %769 = vmatprep.subr.mxu0 0.0
    %770 = vmatpush1.msra.mxu0 0.0
    %771 = vmatprep.subr.mxu0 0.0
    %772 = vmatpush1.msra.mxu0 0.0
    %773 = vmatprep.mubr.f32.mxu0 0.0
    %v774 = vand.u32 %v700, 4294901760
    %v775 = vsub.f32 %v700, %v774
    %v776 = vand.u32 %v775, 4294901760
    %v777 = vsub.f32 %v775, %v776
    %v778 = vand.u32 %v777, 4294901760
    %779 = vmatmul.mubr.f32.gmra.mrb[0].mxu0 %v778
    %v780 = vpop.f32.mrb[0].mxu0
    %v781 = vadd.f32 0.0, %v780
    %v782 = vpop.f32.mrb[0].mxu0
    %783 = vmatprep.mubr.f32.mxu0 0.0
    %v784 = vand.u32 %v703, 4294901760
    %v785 = vsub.f32 %v703, %v784
    %v786 = vand.u32 %v785, 4294901760
    %v787 = vsub.f32 %v785, %v786
    %v788 = vand.u32 %v787, 4294901760
    %789 = vmatmul.mubr.f32.gmra.mrb[0].mxu0 %v788
    %v790 = vpop.f32.mrb[0].mxu0
    %v791 = vadd.f32 0.0, %v790
    %v792 = vpop.f32.mrb[0].mxu0
    %793 = vdwg.mxu0
    %794 = vmatprep.subr.mxu0 0.0
    %v795 = vand.u32 %v39, 4294901760
    %v796 = vsub.f32 %v39, %v795
    %v797 = vand.u32 %v796, 4294901760
    %v798 = vsub.f32 %v796, %v797
    %v799 = vand.u32 %v798, 4294901760
    %800 = vmatpush1.msra.mxu0 %v799
    %801 = vmatprep.subr.mxu0 0.0
    %v802 = vand.u32 %v40, 4294901760
    %v803 = vsub.f32 %v40, %v802
    %v804 = vand.u32 %v803, 4294901760
    %v805 = vsub.f32 %v803, %v804
    %v806 = vand.u32 %v805, 4294901760
    %807 = vmatpush1.msra.mxu0 %v806
    %808 = vmatprep.subr.mxu0 0.0
    %v809 = vand.u32 %v41, 4294901760
    %v810 = vsub.f32 %v41, %v809
    %v811 = vand.u32 %v810, 4294901760
    %v812 = vsub.f32 %v810, %v811
    %v813 = vand.u32 %v812, 4294901760
    %814 = vmatpush1.msra.mxu0 %v813
    %815 = vmatprep.subr.mxu0 0.0
    %v816 = vand.u32 %v42, 4294901760
    %v817 = vsub.f32 %v42, %v816
    %v818 = vand.u32 %v817, 4294901760
    %v819 = vsub.f32 %v817, %v818
    %v820 = vand.u32 %v819, 4294901760
    %821 = vmatpush1.msra.mxu0 %v820
    %822 = vmatprep.subr.mxu0 0.0
    %823 = vmatpush1.msra.mxu0 0.0
    %824 = vmatprep.subr.mxu0 0.0
    %825 = vmatpush1.msra.mxu0 0.0
    %826 = vmatprep.subr.mxu0 0.0
    %827 = vmatpush1.msra.mxu0 0.0
    %828 = vmatprep.subr.mxu0 0.0
    %829 = vmatpush1.msra.mxu0 0.0
    %830 = vmatprep.subr.mxu0 0.0
    %831 = vmatpush1.msra.mxu0 0.0
    %832 = vmatprep.subr.mxu0 0.0
    %833 = vmatpush1.msra.mxu0 0.0
    %834 = vmatprep.subr.mxu0 0.0
    %835 = vmatpush1.msra.mxu0 0.0
    %836 = vmatprep.subr.mxu0 0.0
    %837 = vmatpush1.msra.mxu0 0.0
    %838 = vmatprep.subr.mxu0 0.0
    %839 = vmatpush1.msra.mxu0 0.0
    %840 = vmatprep.subr.mxu0 0.0
    %841 = vmatpush1.msra.mxu0 0.0
    %842 = vmatprep.subr.mxu0 0.0
    %843 = vmatpush1.msra.mxu0 0.0
    %844 = vmatprep.subr.mxu0 0.0
    %845 = vmatpush1.msra.mxu0 0.0
    %846 = vmatprep.subr.mxu0 0.0
    %847 = vmatpush1.msra.mxu0 0.0
    %848 = vmatprep.subr.mxu0 0.0
    %849 = vmatpush1.msra.mxu0 0.0
    %850 = vmatprep.subr.mxu0 0.0
    %851 = vmatpush1.msra.mxu0 0.0
    %852 = vmatprep.subr.mxu0 0.0
    %853 = vmatpush1.msra.mxu0 0.0
    %854 = vmatprep.subr.mxu0 0.0
    %855 = vmatpush1.msra.mxu0 0.0
    %856 = vmatprep.subr.mxu0 0.0
    %857 = vmatpush1.msra.mxu0 0.0
    %858 = vmatprep.subr.mxu0 0.0
    %859 = vmatpush1.msra.mxu0 0.0
    %860 = vmatprep.subr.mxu0 0.0
    %861 = vmatpush1.msra.mxu0 0.0
    %862 = vmatprep.subr.mxu0 0.0
    %863 = vmatpush1.msra.mxu0 0.0
    %864 = vmatprep.subr.mxu0 0.0
    %865 = vmatpush1.msra.mxu0 0.0
    %866 = vmatprep.subr.mxu0 0.0
    %867 = vmatpush1.msra.mxu0 0.0
    %868 = vmatprep.subr.mxu0 0.0
    %869 = vmatpush1.msra.mxu0 0.0
    %870 = vmatprep.subr.mxu0 0.0
    %871 = vmatpush1.msra.mxu0 0.0
    %872 = vmatprep.subr.mxu0 0.0
    %873 = vmatpush1.msra.mxu0 0.0
    %874 = vmatprep.subr.mxu0 0.0
    %875 = vmatpush1.msra.mxu0 0.0
    %876 = vmatprep.subr.mxu0 0.0
    %877 = vmatpush1.msra.mxu0 0.0
    %878 = vmatprep.mubr.f32.mxu0 0.0
    %v879 = vand.u32 %v700, 4294901760
    %880 = vmatmul.mubr.f32.gmra.mrb[0].mxu0 %v879
    %v881 = vpop.f32.mrb[0].mxu0
    %v882 = vadd.f32 %v781, %v881
    %v883 = vpop.f32.mrb[0].mxu0
    %884 = vmatprep.mubr.f32.mxu0 0.0
    %v885 = vand.u32 %v703, 4294901760
    %886 = vmatmul.mubr.f32.gmra.mrb[0].mxu0 %v885
    %v887 = vpop.f32.mrb[0].mxu0
    %v888 = vadd.f32 %v791, %v887
    %v889 = vpop.f32.mrb[0].mxu0
    %890 = vdwg.mxu0
    %891 = vmatprep.subr.mxu0 0.0
    %v892 = vand.u32 %v39, 4294901760
    %v893 = vsub.f32 %v39, %v892
    %894 = vmatpush1.msra.mxu0 %v893
    %895 = vmatprep.subr.mxu0 0.0
    %v896 = vand.u32 %v40, 4294901760
    %v897 = vsub.f32 %v40, %v896
    %898 = vmatpush1.msra.mxu0 %v897
    %899 = vmatprep.subr.mxu0 0.0
    %v900 = vand.u32 %v41, 4294901760
    %v901 = vsub.f32 %v41, %v900
    %902 = vmatpush1.msra.mxu0 %v901
    %903 = vmatprep.subr.mxu0 0.0
    %v904 = vand.u32 %v42, 4294901760
    %v905 = vsub.f32 %v42, %v904
    %906 = vmatpush1.msra.mxu0 %v905
    %907 = vmatprep.subr.mxu0 0.0
    %908 = vmatpush1.msra.mxu0 0.0
    %909 = vmatprep.subr.mxu0 0.0
    %910 = vmatpush1.msra.mxu0 0.0
    %911 = vmatprep.subr.mxu0 0.0
    %912 = vmatpush1.msra.mxu0 0.0
    %913 = vmatprep.subr.mxu0 0.0
    %914 = vmatpush1.msra.mxu0 0.0
    %915 = vmatprep.subr.mxu0 0.0
    %916 = vmatpush1.msra.mxu0 0.0
    %917 = vmatprep.subr.mxu0 0.0
    %918 = vmatpush1.msra.mxu0 0.0
    %919 = vmatprep.subr.mxu0 0.0
    %920 = vmatpush1.msra.mxu0 0.0
    %921 = vmatprep.subr.mxu0 0.0
    %922 = vmatpush1.msra.mxu0 0.0
    %923 = vmatprep.subr.mxu0 0.0
    %924 = vmatpush1.msra.mxu0 0.0
    %925 = vmatprep.subr.mxu0 0.0
    %926 = vmatpush1.msra.mxu0 0.0
    %927 = vmatprep.subr.mxu0 0.0
    %928 = vmatpush1.msra.mxu0 0.0
    %929 = vmatprep.subr.mxu0 0.0
    %930 = vmatpush1.msra.mxu0 0.0
    %931 = vmatprep.subr.mxu0 0.0
    %932 = vmatpush1.msra.mxu0 0.0
    %933 = vmatprep.subr.mxu0 0.0
    %934 = vmatpush1.msra.mxu0 0.0
    %935 = vmatprep.subr.mxu0 0.0
    %936 = vmatpush1.msra.mxu0 0.0
    %937 = vmatprep.subr.mxu0 0.0
    %938 = vmatpush1.msra.mxu0 0.0
    %939 = vmatprep.subr.mxu0 0.0
    %940 = vmatpush1.msra.mxu0 0.0
    %941 = vmatprep.subr.mxu0 0.0
    %942 = vmatpush1.msra.mxu0 0.0
    %943 = vmatprep.subr.mxu0 0.0
    %944 = vmatpush1.msra.mxu0 0.0
    %945 = vmatprep.subr.mxu0 0.0
    %946 = vmatpush1.msra.mxu0 0.0
    %947 = vmatprep.subr.mxu0 0.0
    %948 = vmatpush1.msra.mxu0 0.0
    %949 = vmatprep.subr.mxu0 0.0
    %950 = vmatpush1.msra.mxu0 0.0
    %951 = vmatprep.subr.mxu0 0.0
    %952 = vmatpush1.msra.mxu0 0.0
    %953 = vmatprep.subr.mxu0 0.0
    %954 = vmatpush1.msra.mxu0 0.0
    %955 = vmatprep.subr.mxu0 0.0
    %956 = vmatpush1.msra.mxu0 0.0
    %957 = vmatprep.subr.mxu0 0.0
    %958 = vmatpush1.msra.mxu0 0.0
    %959 = vmatprep.subr.mxu0 0.0
    %960 = vmatpush1.msra.mxu0 0.0
    %961 = vmatprep.subr.mxu0 0.0
    %962 = vmatpush1.msra.mxu0 0.0
    %963 = vmatprep.mubr.f32.mxu0 0.0
    %v964 = vand.u32 %v700, 4294901760
    %v965 = vsub.f32 %v700, %v964
    %966 = vmatmul.mubr.f32.gmra.mrb[0].mxu0 %v965
    %v967 = vpop.f32.mrb[0].mxu0
    %v968 = vadd.f32 %v882, %v967
    %v969 = vpop.f32.mrb[0].mxu0
    %970 = vmatprep.mubr.f32.mxu0 0.0
    %v971 = vand.u32 %v703, 4294901760
    %v972 = vsub.f32 %v703, %v971
    %973 = vmatmul.mubr.f32.gmra.mrb[0].mxu0 %v972
    %v974 = vpop.f32.mrb[0].mxu0
    %v975 = vadd.f32 %v888, %v974
    %v976 = vpop.f32.mrb[0].mxu0
    %977 = vdwg.mxu0
    %978 = vmatprep.subr.mxu0 0.0
    %v979 = vand.u32 %v39, 4294901760
    %980 = vmatpush1.msra.mxu0 %v979
    %981 = vmatprep.subr.mxu0 0.0
    %v982 = vand.u32 %v40, 4294901760
    %983 = vmatpush1.msra.mxu0 %v982
    %984 = vmatprep.subr.mxu0 0.0
    %v985 = vand.u32 %v41, 4294901760
    %986 = vmatpush1.msra.mxu0 %v985
    %987 = vmatprep.subr.mxu0 0.0
    %v988 = vand.u32 %v42, 4294901760
    %989 = vmatpush1.msra.mxu0 %v988
    %990 = vmatprep.subr.mxu0 0.0
    %991 = vmatpush1.msra.mxu0 0.0
    %992 = vmatprep.subr.mxu0 0.0
    %993 = vmatpush1.msra.mxu0 0.0
    %994 = vmatprep.subr.mxu0 0.0
    %995 = vmatpush1.msra.mxu0 0.0
    %996 = vmatprep.subr.mxu0 0.0
    %997 = vmatpush1.msra.mxu0 0.0
    %998 = vmatprep.subr.mxu0 0.0
    %999 = vmatpush1.msra.mxu0 0.0
    %1000 = vmatprep.subr.mxu0 0.0
    %1001 = vmatpush1.msra.mxu0 0.0
    %1002 = vmatprep.subr.mxu0 0.0
    %1003 = vmatpush1.msra.mxu0 0.0
    %1004 = vmatprep.subr.mxu0 0.0
    %1005 = vmatpush1.msra.mxu0 0.0
    %1006 = vmatprep.subr.mxu0 0.0
    %1007 = vmatpush1.msra.mxu0 0.0
    %1008 = vmatprep.subr.mxu0 0.0
    %1009 = vmatpush1.msra.mxu0 0.0
    %1010 = vmatprep.subr.mxu0 0.0
    %1011 = vmatpush1.msra.mxu0 0.0
    %1012 = vmatprep.subr.mxu0 0.0
    %1013 = vmatpush1.msra.mxu0 0.0
    %1014 = vmatprep.subr.mxu0 0.0
    %1015 = vmatpush1.msra.mxu0 0.0
    %1016 = vmatprep.subr.mxu0 0.0
    %1017 = vmatpush1.msra.mxu0 0.0
    %1018 = vmatprep.subr.mxu0 0.0
    %1019 = vmatpush1.msra.mxu0 0.0
    %1020 = vmatprep.subr.mxu0 0.0
    %1021 = vmatpush1.msra.mxu0 0.0
    %1022 = vmatprep.subr.mxu0 0.0
    %1023 = vmatpush1.msra.mxu0 0.0
    %1024 = vmatprep.subr.mxu0 0.0
    %1025 = vmatpush1.msra.mxu0 0.0
    %1026 = vmatprep.subr.mxu0 0.0
    %1027 = vmatpush1.msra.mxu0 0.0
    %1028 = vmatprep.subr.mxu0 0.0
    %1029 = vmatpush1.msra.mxu0 0.0
    %1030 = vmatprep.subr.mxu0 0.0
    %1031 = vmatpush1.msra.mxu0 0.0
    %1032 = vmatprep.subr.mxu0 0.0
    %1033 = vmatpush1.msra.mxu0 0.0
    %1034 = vmatprep.subr.mxu0 0.0
    %1035 = vmatpush1.msra.mxu0 0.0
    %1036 = vmatprep.subr.mxu0 0.0
    %1037 = vmatpush1.msra.mxu0 0.0
    %1038 = vmatprep.subr.mxu0 0.0
    %1039 = vmatpush1.msra.mxu0 0.0
    %1040 = vmatprep.subr.mxu0 0.0
    %1041 = vmatpush1.msra.mxu0 0.0
    %1042 = vmatprep.subr.mxu0 0.0
    %1043 = vmatpush1.msra.mxu0 0.0
    %1044 = vmatprep.subr.mxu0 0.0
    %1045 = vmatpush1.msra.mxu0 0.0
    %1046 = vmatprep.mubr.f32.mxu0 0.0
    %v1047 = vand.u32 %v700, 4294901760
    %v1048 = vsub.f32 %v700, %v1047
    %v1049 = vand.u32 %v1048, 4294901760
    %1050 = vmatmul.mubr.f32.gmra.mrb[0].mxu0 %v1049
    %v1051 = vpop.f32.mrb[0].mxu0
    %v1052 = vadd.f32 %v968, %v1051
    %v1053 = vpop.f32.mrb[0].mxu0
    %1054 = vmatprep.mubr.f32.mxu0 0.0
    %v1055 = vand.u32 %v703, 4294901760
    %v1056 = vsub.f32 %v703, %v1055
    %v1057 = vand.u32 %v1056, 4294901760
    %1058 = vmatmul.mubr.f32.gmra.mrb[0].mxu0 %v1057
    %v1059 = vpop.f32.mrb[0].mxu0
    %v1060 = vadd.f32 %v975, %v1059
    %v1061 = vpop.f32.mrb[0].mxu0
    %1062 = vdwg.mxu0
    %1063 = vmatprep.subr.mxu0 0.0
    %v1064 = vand.u32 %v39, 4294901760
    %v1065 = vsub.f32 %v39, %v1064
    %v1066 = vand.u32 %v1065, 4294901760
    %1067 = vmatpush1.msra.mxu0 %v1066
    %1068 = vmatprep.subr.mxu0 0.0
    %v1069 = vand.u32 %v40, 4294901760
    %v1070 = vsub.f32 %v40, %v1069
    %v1071 = vand.u32 %v1070, 4294901760
    %1072 = vmatpush1.msra.mxu0 %v1071
    %1073 = vmatprep.subr.mxu0 0.0
    %v1074 = vand.u32 %v41, 4294901760
    %v1075 = vsub.f32 %v41, %v1074
    %v1076 = vand.u32 %v1075, 4294901760
    %1077 = vmatpush1.msra.mxu0 %v1076
    %1078 = vmatprep.subr.mxu0 0.0
    %v1079 = vand.u32 %v42, 4294901760
    %v1080 = vsub.f32 %v42, %v1079
    %v1081 = vand.u32 %v1080, 4294901760
    %1082 = vmatpush1.msra.mxu0 %v1081
    %1083 = vmatprep.subr.mxu0 0.0
    %1084 = vmatpush1.msra.mxu0 0.0
    %1085 = vmatprep.subr.mxu0 0.0
    %1086 = vmatpush1.msra.mxu0 0.0
    %1087 = vmatprep.subr.mxu0 0.0
    %1088 = vmatpush1.msra.mxu0 0.0
    %1089 = vmatprep.subr.mxu0 0.0
    %1090 = vmatpush1.msra.mxu0 0.0
    %1091 = vmatprep.subr.mxu0 0.0
    %1092 = vmatpush1.msra.mxu0 0.0
    %1093 = vmatprep.subr.mxu0 0.0
    %1094 = vmatpush1.msra.mxu0 0.0
    %1095 = vmatprep.subr.mxu0 0.0
    %1096 = vmatpush1.msra.mxu0 0.0
    %1097 = vmatprep.subr.mxu0 0.0
    %1098 = vmatpush1.msra.mxu0 0.0
    %1099 = vmatprep.subr.mxu0 0.0
    %1100 = vmatpush1.msra.mxu0 0.0
    %1101 = vmatprep.subr.mxu0 0.0
    %1102 = vmatpush1.msra.mxu0 0.0
    %1103 = vmatprep.subr.mxu0 0.0
    %1104 = vmatpush1.msra.mxu0 0.0
    %1105 = vmatprep.subr.mxu0 0.0
    %1106 = vmatpush1.msra.mxu0 0.0
    %1107 = vmatprep.subr.mxu0 0.0
    %1108 = vmatpush1.msra.mxu0 0.0
    %1109 = vmatprep.subr.mxu0 0.0
    %1110 = vmatpush1.msra.mxu0 0.0
    %1111 = vmatprep.subr.mxu0 0.0
    %1112 = vmatpush1.msra.mxu0 0.0
    %1113 = vmatprep.subr.mxu0 0.0
    %1114 = vmatpush1.msra.mxu0 0.0
    %1115 = vmatprep.subr.mxu0 0.0
    %1116 = vmatpush1.msra.mxu0 0.0
    %1117 = vmatprep.subr.mxu0 0.0
    %1118 = vmatpush1.msra.mxu0 0.0
    %1119 = vmatprep.subr.mxu0 0.0
    %1120 = vmatpush1.msra.mxu0 0.0
    %1121 = vmatprep.subr.mxu0 0.0
    %1122 = vmatpush1.msra.mxu0 0.0
    %1123 = vmatprep.subr.mxu0 0.0
    %1124 = vmatpush1.msra.mxu0 0.0
    %1125 = vmatprep.subr.mxu0 0.0
    %1126 = vmatpush1.msra.mxu0 0.0
    %1127 = vmatprep.subr.mxu0 0.0
    %1128 = vmatpush1.msra.mxu0 0.0
    %1129 = vmatprep.subr.mxu0 0.0
    %1130 = vmatpush1.msra.mxu0 0.0
    %1131 = vmatprep.subr.mxu0 0.0
    %1132 = vmatpush1.msra.mxu0 0.0
    %1133 = vmatprep.subr.mxu0 0.0
    %1134 = vmatpush1.msra.mxu0 0.0
    %1135 = vmatprep.subr.mxu0 0.0
    %1136 = vmatpush1.msra.mxu0 0.0
    %1137 = vmatprep.subr.mxu0 0.0
    %1138 = vmatpush1.msra.mxu0 0.0
    %1139 = vmatprep.mubr.f32.mxu0 0.0
    %v1140 = vand.u32 %v700, 4294901760
    %1141 = vmatmul.mubr.f32.gmra.mrb[0].mxu0 %v1140
    %v1142 = vpop.f32.mrb[0].mxu0
    %v1143 = vadd.f32 %v1052, %v1142
    %v1144 = vpop.f32.mrb[0].mxu0
    %1145 = vmatprep.mubr.f32.mxu0 0.0
    %v1146 = vand.u32 %v703, 4294901760
    %1147 = vmatmul.mubr.f32.gmra.mrb[0].mxu0 %v1146
    %v1148 = vpop.f32.mrb[0].mxu0
    %v1149 = vadd.f32 %v1060, %v1148
    %v1150 = vpop.f32.mrb[0].mxu0
    %1151 = vdwg.mxu0
    %1152 = vmatprep.subr.mxu0 0.0
    %v1153 = vand.u32 %v39, 4294901760
    %1154 = vmatpush1.msra.mxu0 %v1153
    %1155 = vmatprep.subr.mxu0 0.0
    %v1156 = vand.u32 %v40, 4294901760
    %1157 = vmatpush1.msra.mxu0 %v1156
    %1158 = vmatprep.subr.mxu0 0.0
    %v1159 = vand.u32 %v41, 4294901760
    %1160 = vmatpush1.msra.mxu0 %v1159
    %1161 = vmatprep.subr.mxu0 0.0
    %v1162 = vand.u32 %v42, 4294901760
    %1163 = vmatpush1.msra.mxu0 %v1162
    %1164 = vmatprep.subr.mxu0 0.0
    %1165 = vmatpush1.msra.mxu0 0.0
    %1166 = vmatprep.subr.mxu0 0.0
    %1167 = vmatpush1.msra.mxu0 0.0
    %1168 = vmatprep.subr.mxu0 0.0
    %1169 = vmatpush1.msra.mxu0 0.0
    %1170 = vmatprep.subr.mxu0 0.0
    %1171 = vmatpush1.msra.mxu0 0.0
    %1172 = vmatprep.subr.mxu0 0.0
    %1173 = vmatpush1.msra.mxu0 0.0
    %1174 = vmatprep.subr.mxu0 0.0
    %1175 = vmatpush1.msra.mxu0 0.0
    %1176 = vmatprep.subr.mxu0 0.0
    %1177 = vmatpush1.msra.mxu0 0.0
    %1178 = vmatprep.subr.mxu0 0.0
    %1179 = vmatpush1.msra.mxu0 0.0
    %1180 = vmatprep.subr.mxu0 0.0
    %1181 = vmatpush1.msra.mxu0 0.0
    %1182 = vmatprep.subr.mxu0 0.0
    %1183 = vmatpush1.msra.mxu0 0.0
    %1184 = vmatprep.subr.mxu0 0.0
    %1185 = vmatpush1.msra.mxu0 0.0
    %1186 = vmatprep.subr.mxu0 0.0
    %1187 = vmatpush1.msra.mxu0 0.0
    %1188 = vmatprep.subr.mxu0 0.0
    %1189 = vmatpush1.msra.mxu0 0.0
    %1190 = vmatprep.subr.mxu0 0.0
    %1191 = vmatpush1.msra.mxu0 0.0
    %1192 = vmatprep.subr.mxu0 0.0
    %1193 = vmatpush1.msra.mxu0 0.0
    %1194 = vmatprep.subr.mxu0 0.0
    %1195 = vmatpush1.msra.mxu0 0.0
    %1196 = vmatprep.subr.mxu0 0.0
    %1197 = vmatpush1.msra.mxu0 0.0
    %1198 = vmatprep.subr.mxu0 0.0
    %1199 = vmatpush1.msra.mxu0 0.0
    %1200 = vmatprep.subr.mxu0 0.0
    %1201 = vmatpush1.msra.mxu0 0.0
    %1202 = vmatprep.subr.mxu0 0.0
    %1203 = vmatpush1.msra.mxu0 0.0
    %1204 = vmatprep.subr.mxu0 0.0
    %1205 = vmatpush1.msra.mxu0 0.0
    %1206 = vmatprep.subr.mxu0 0.0
    %1207 = vmatpush1.msra.mxu0 0.0
    %1208 = vmatprep.subr.mxu0 0.0
    %1209 = vmatpush1.msra.mxu0 0.0
    %1210 = vmatprep.subr.mxu0 0.0
    %1211 = vmatpush1.msra.mxu0 0.0
    %1212 = vmatprep.subr.mxu0 0.0
    %1213 = vmatpush1.msra.mxu0 0.0
    %1214 = vmatprep.subr.mxu0 0.0
    %1215 = vmatpush1.msra.mxu0 0.0
    %1216 = vmatprep.subr.mxu0 0.0
    %1217 = vmatpush1.msra.mxu0 0.0
    %1218 = vmatprep.subr.mxu0 0.0
    %1219 = vmatpush1.msra.mxu0 0.0
    %1220 = vmatprep.mubr.f32.mxu0 0.0
    %v1221 = vand.u32 %v700, 4294901760
    %1222 = vmatmul.mubr.f32.gmra.mrb[0].mxu0 %v1221
    %v1223 = vpop.f32.mrb[0].mxu0
    %v1224 = vadd.f32 %v1143, %v1223
    %v1225 = vpop.f32.mrb[0].mxu0
    %1226 = vmatprep.mubr.f32.mxu0 0.0
    %v1227 = vand.u32 %v703, 4294901760
    %1228 = vmatmul.mubr.f32.gmra.mrb[0].mxu0 %v1227
    %v1229 = vpop.f32.mrb[0].mxu0
    %v1230 = vadd.f32 %v1149, %v1229
    %v1231 = vpop.f32.mrb[0].mxu0
    %1232 = vdwg.mxu0
    %v1234 = vsel %vm140, %v55, 0
    %v1237 = vsel %vm140, %v56, 0
    %1239 = vmatprep.subr.mxu0 0.0
    %v1240 = vand.u32 %v43, 4294901760
    %1241 = vmatpush1.msra.mxu0 %v1240
    %1242 = vmatprep.subr.mxu0 0.0
    %v1243 = vand.u32 %v44, 4294901760
    %1244 = vmatpush1.msra.mxu0 %v1243
    %1245 = vmatprep.subr.mxu0 0.0
    %v1246 = vand.u32 %v45, 4294901760
    %1247 = vmatpush1.msra.mxu0 %v1246
    %1248 = vmatprep.subr.mxu0 0.0
    %v1249 = vand.u32 %v46, 4294901760
    %1250 = vmatpush1.msra.mxu0 %v1249
    %1251 = vmatprep.subr.mxu0 0.0
    %1252 = vmatpush1.msra.mxu0 0.0
    %1253 = vmatprep.subr.mxu0 0.0
    %1254 = vmatpush1.msra.mxu0 0.0
    %1255 = vmatprep.subr.mxu0 0.0
    %1256 = vmatpush1.msra.mxu0 0.0
    %1257 = vmatprep.subr.mxu0 0.0
    %1258 = vmatpush1.msra.mxu0 0.0
    %1259 = vmatprep.subr.mxu0 0.0
    %1260 = vmatpush1.msra.mxu0 0.0
    %1261 = vmatprep.subr.mxu0 0.0
    %1262 = vmatpush1.msra.mxu0 0.0
    %1263 = vmatprep.subr.mxu0 0.0
    %1264 = vmatpush1.msra.mxu0 0.0
    %1265 = vmatprep.subr.mxu0 0.0
    %1266 = vmatpush1.msra.mxu0 0.0
    %1267 = vmatprep.subr.mxu0 0.0
    %1268 = vmatpush1.msra.mxu0 0.0
    %1269 = vmatprep.subr.mxu0 0.0
    %1270 = vmatpush1.msra.mxu0 0.0
    %1271 = vmatprep.subr.mxu0 0.0
    %1272 = vmatpush1.msra.mxu0 0.0
    %1273 = vmatprep.subr.mxu0 0.0
    %1274 = vmatpush1.msra.mxu0 0.0
    %1275 = vmatprep.subr.mxu0 0.0
    %1276 = vmatpush1.msra.mxu0 0.0
    %1277 = vmatprep.subr.mxu0 0.0
    %1278 = vmatpush1.msra.mxu0 0.0
    %1279 = vmatprep.subr.mxu0 0.0
    %1280 = vmatpush1.msra.mxu0 0.0
    %1281 = vmatprep.subr.mxu0 0.0
    %1282 = vmatpush1.msra.mxu0 0.0
    %1283 = vmatprep.subr.mxu0 0.0
    %1284 = vmatpush1.msra.mxu0 0.0
    %1285 = vmatprep.subr.mxu0 0.0
    %1286 = vmatpush1.msra.mxu0 0.0
    %1287 = vmatprep.subr.mxu0 0.0
    %1288 = vmatpush1.msra.mxu0 0.0
    %1289 = vmatprep.subr.mxu0 0.0
    %1290 = vmatpush1.msra.mxu0 0.0
    %1291 = vmatprep.subr.mxu0 0.0
    %1292 = vmatpush1.msra.mxu0 0.0
    %1293 = vmatprep.subr.mxu0 0.0
    %1294 = vmatpush1.msra.mxu0 0.0
    %1295 = vmatprep.subr.mxu0 0.0
    %1296 = vmatpush1.msra.mxu0 0.0
    %1297 = vmatprep.subr.mxu0 0.0
    %1298 = vmatpush1.msra.mxu0 0.0
    %1299 = vmatprep.subr.mxu0 0.0
    %1300 = vmatpush1.msra.mxu0 0.0
    %1301 = vmatprep.subr.mxu0 0.0
    %1302 = vmatpush1.msra.mxu0 0.0
    %1303 = vmatprep.subr.mxu0 0.0
    %1304 = vmatpush1.msra.mxu0 0.0
    %1305 = vmatprep.subr.mxu0 0.0
    %1306 = vmatpush1.msra.mxu0 0.0
    %1307 = vmatprep.mubr.f32.mxu0 0.0
    %v1308 = vand.u32 %v1234, 4294901760
    %v1309 = vsub.f32 %v1234, %v1308
    %v1310 = vand.u32 %v1309, 4294901760
    %v1311 = vsub.f32 %v1309, %v1310
    %v1312 = vand.u32 %v1311, 4294901760
    %1313 = vmatmul.mubr.f32.gmra.mrb[0].mxu0 %v1312
    %v1314 = vpop.f32.mrb[0].mxu0
    %v1315 = vadd.f32 0.0, %v1314
    %v1316 = vpop.f32.mrb[0].mxu0
    %1317 = vmatprep.mubr.f32.mxu0 0.0
    %v1318 = vand.u32 %v1237, 4294901760
    %v1319 = vsub.f32 %v1237, %v1318
    %v1320 = vand.u32 %v1319, 4294901760
    %v1321 = vsub.f32 %v1319, %v1320
    %v1322 = vand.u32 %v1321, 4294901760
    %1323 = vmatmul.mubr.f32.gmra.mrb[0].mxu0 %v1322
    %v1324 = vpop.f32.mrb[0].mxu0
    %v1325 = vadd.f32 0.0, %v1324
    %v1326 = vpop.f32.mrb[0].mxu0
    %1327 = vdwg.mxu0
    %1328 = vmatprep.subr.mxu0 0.0
    %v1329 = vand.u32 %v43, 4294901760
    %v1330 = vsub.f32 %v43, %v1329
    %v1331 = vand.u32 %v1330, 4294901760
    %v1332 = vsub.f32 %v1330, %v1331
    %v1333 = vand.u32 %v1332, 4294901760
    %1334 = vmatpush1.msra.mxu0 %v1333
    %1335 = vmatprep.subr.mxu0 0.0
    %v1336 = vand.u32 %v44, 4294901760
    %v1337 = vsub.f32 %v44, %v1336
    %v1338 = vand.u32 %v1337, 4294901760
    %v1339 = vsub.f32 %v1337, %v1338
    %v1340 = vand.u32 %v1339, 4294901760
    %1341 = vmatpush1.msra.mxu0 %v1340
    %1342 = vmatprep.subr.mxu0 0.0
    %v1343 = vand.u32 %v45, 4294901760
    %v1344 = vsub.f32 %v45, %v1343
    %v1345 = vand.u32 %v1344, 4294901760
    %v1346 = vsub.f32 %v1344, %v1345
    %v1347 = vand.u32 %v1346, 4294901760
    %1348 = vmatpush1.msra.mxu0 %v1347
    %1349 = vmatprep.subr.mxu0 0.0
    %v1350 = vand.u32 %v46, 4294901760
    %v1351 = vsub.f32 %v46, %v1350
    %v1352 = vand.u32 %v1351, 4294901760
    %v1353 = vsub.f32 %v1351, %v1352
    %v1354 = vand.u32 %v1353, 4294901760
    %1355 = vmatpush1.msra.mxu0 %v1354
    %1356 = vmatprep.subr.mxu0 0.0
    %1357 = vmatpush1.msra.mxu0 0.0
    %1358 = vmatprep.subr.mxu0 0.0
    %1359 = vmatpush1.msra.mxu0 0.0
    %1360 = vmatprep.subr.mxu0 0.0
    %1361 = vmatpush1.msra.mxu0 0.0
    %1362 = vmatprep.subr.mxu0 0.0
    %1363 = vmatpush1.msra.mxu0 0.0
    %1364 = vmatprep.subr.mxu0 0.0
    %1365 = vmatpush1.msra.mxu0 0.0
    %1366 = vmatprep.subr.mxu0 0.0
    %1367 = vmatpush1.msra.mxu0 0.0
    %1368 = vmatprep.subr.mxu0 0.0
    %1369 = vmatpush1.msra.mxu0 0.0
    %1370 = vmatprep.subr.mxu0 0.0
    %1371 = vmatpush1.msra.mxu0 0.0
    %1372 = vmatprep.subr.mxu0 0.0
    %1373 = vmatpush1.msra.mxu0 0.0
    %1374 = vmatprep.subr.mxu0 0.0
    %1375 = vmatpush1.msra.mxu0 0.0
    %1376 = vmatprep.subr.mxu0 0.0
    %1377 = vmatpush1.msra.mxu0 0.0
    %1378 = vmatprep.subr.mxu0 0.0
    %1379 = vmatpush1.msra.mxu0 0.0
    %1380 = vmatprep.subr.mxu0 0.0
    %1381 = vmatpush1.msra.mxu0 0.0
    %1382 = vmatprep.subr.mxu0 0.0
    %1383 = vmatpush1.msra.mxu0 0.0
    %1384 = vmatprep.subr.mxu0 0.0
    %1385 = vmatpush1.msra.mxu0 0.0
    %1386 = vmatprep.subr.mxu0 0.0
    %1387 = vmatpush1.msra.mxu0 0.0
    %1388 = vmatprep.subr.mxu0 0.0
    %1389 = vmatpush1.msra.mxu0 0.0
    %1390 = vmatprep.subr.mxu0 0.0
    %1391 = vmatpush1.msra.mxu0 0.0
    %1392 = vmatprep.subr.mxu0 0.0
    %1393 = vmatpush1.msra.mxu0 0.0
    %1394 = vmatprep.subr.mxu0 0.0
    %1395 = vmatpush1.msra.mxu0 0.0
    %1396 = vmatprep.subr.mxu0 0.0
    %1397 = vmatpush1.msra.mxu0 0.0
    %1398 = vmatprep.subr.mxu0 0.0
    %1399 = vmatpush1.msra.mxu0 0.0
    %1400 = vmatprep.subr.mxu0 0.0
    %1401 = vmatpush1.msra.mxu0 0.0
    %1402 = vmatprep.subr.mxu0 0.0
    %1403 = vmatpush1.msra.mxu0 0.0
    %1404 = vmatprep.subr.mxu0 0.0
    %1405 = vmatpush1.msra.mxu0 0.0
    %1406 = vmatprep.subr.mxu0 0.0
    %1407 = vmatpush1.msra.mxu0 0.0
    %1408 = vmatprep.subr.mxu0 0.0
    %1409 = vmatpush1.msra.mxu0 0.0
    %1410 = vmatprep.subr.mxu0 0.0
    %1411 = vmatpush1.msra.mxu0 0.0
    %1412 = vmatprep.mubr.f32.mxu0 0.0
    %v1413 = vand.u32 %v1234, 4294901760
    %1414 = vmatmul.mubr.f32.gmra.mrb[0].mxu0 %v1413
    %v1415 = vpop.f32.mrb[0].mxu0
    %v1416 = vadd.f32 %v1315, %v1415
    %v1417 = vpop.f32.mrb[0].mxu0
    %1418 = vmatprep.mubr.f32.mxu0 0.0
    %v1419 = vand.u32 %v1237, 4294901760
    %1420 = vmatmul.mubr.f32.gmra.mrb[0].mxu0 %v1419
    %v1421 = vpop.f32.mrb[0].mxu0
    %v1422 = vadd.f32 %v1325, %v1421
    %v1423 = vpop.f32.mrb[0].mxu0
    %1424 = vdwg.mxu0
    %1425 = vmatprep.subr.mxu0 0.0
    %v1426 = vand.u32 %v43, 4294901760
    %v1427 = vsub.f32 %v43, %v1426
    %1428 = vmatpush1.msra.mxu0 %v1427
    %1429 = vmatprep.subr.mxu0 0.0
    %v1430 = vand.u32 %v44, 4294901760
    %v1431 = vsub.f32 %v44, %v1430
    %1432 = vmatpush1.msra.mxu0 %v1431
    %1433 = vmatprep.subr.mxu0 0.0
    %v1434 = vand.u32 %v45, 4294901760
    %v1435 = vsub.f32 %v45, %v1434
    %1436 = vmatpush1.msra.mxu0 %v1435
    %1437 = vmatprep.subr.mxu0 0.0
    %v1438 = vand.u32 %v46, 4294901760
    %v1439 = vsub.f32 %v46, %v1438
    %1440 = vmatpush1.msra.mxu0 %v1439
    %1441 = vmatprep.subr.mxu0 0.0
    %1442 = vmatpush1.msra.mxu0 0.0
    %1443 = vmatprep.subr.mxu0 0.0
    %1444 = vmatpush1.msra.mxu0 0.0
    %1445 = vmatprep.subr.mxu0 0.0
    %1446 = vmatpush1.msra.mxu0 0.0
    %1447 = vmatprep.subr.mxu0 0.0
    %1448 = vmatpush1.msra.mxu0 0.0
    %1449 = vmatprep.subr.mxu0 0.0
    %1450 = vmatpush1.msra.mxu0 0.0
    %1451 = vmatprep.subr.mxu0 0.0
    %1452 = vmatpush1.msra.mxu0 0.0
    %1453 = vmatprep.subr.mxu0 0.0
    %1454 = vmatpush1.msra.mxu0 0.0
    %1455 = vmatprep.subr.mxu0 0.0
    %1456 = vmatpush1.msra.mxu0 0.0
    %1457 = vmatprep.subr.mxu0 0.0
    %1458 = vmatpush1.msra.mxu0 0.0
    %1459 = vmatprep.subr.mxu0 0.0
    %1460 = vmatpush1.msra.mxu0 0.0
    %1461 = vmatprep.subr.mxu0 0.0
    %1462 = vmatpush1.msra.mxu0 0.0
    %1463 = vmatprep.subr.mxu0 0.0
    %1464 = vmatpush1.msra.mxu0 0.0
    %1465 = vmatprep.subr.mxu0 0.0
    %1466 = vmatpush1.msra.mxu0 0.0
    %1467 = vmatprep.subr.mxu0 0.0
    %1468 = vmatpush1.msra.mxu0 0.0
    %1469 = vmatprep.subr.mxu0 0.0
    %1470 = vmatpush1.msra.mxu0 0.0
    %1471 = vmatprep.subr.mxu0 0.0
    %1472 = vmatpush1.msra.mxu0 0.0
    %1473 = vmatprep.subr.mxu0 0.0
    %1474 = vmatpush1.msra.mxu0 0.0
    %1475 = vmatprep.subr.mxu0 0.0
    %1476 = vmatpush1.msra.mxu0 0.0
    %1477 = vmatprep.subr.mxu0 0.0
    %1478 = vmatpush1.msra.mxu0 0.0
    %1479 = vmatprep.subr.mxu0 0.0
    %1480 = vmatpush1.msra.mxu0 0.0
    %1481 = vmatprep.subr.mxu0 0.0
    %1482 = vmatpush1.msra.mxu0 0.0
    %1483 = vmatprep.subr.mxu0 0.0
    %1484 = vmatpush1.msra.mxu0 0.0
    %1485 = vmatprep.subr.mxu0 0.0
    %1486 = vmatpush1.msra.mxu0 0.0
    %1487 = vmatprep.subr.mxu0 0.0
    %1488 = vmatpush1.msra.mxu0 0.0
    %1489 = vmatprep.subr.mxu0 0.0
    %1490 = vmatpush1.msra.mxu0 0.0
    %1491 = vmatprep.subr.mxu0 0.0
    %1492 = vmatpush1.msra.mxu0 0.0
    %1493 = vmatprep.subr.mxu0 0.0
    %1494 = vmatpush1.msra.mxu0 0.0
    %1495 = vmatprep.subr.mxu0 0.0
    %1496 = vmatpush1.msra.mxu0 0.0
    %1497 = vmatprep.mubr.f32.mxu0 0.0
    %v1498 = vand.u32 %v1234, 4294901760
    %v1499 = vsub.f32 %v1234, %v1498
    %1500 = vmatmul.mubr.f32.gmra.mrb[0].mxu0 %v1499
    %v1501 = vpop.f32.mrb[0].mxu0
    %v1502 = vadd.f32 %v1416, %v1501
    %v1503 = vpop.f32.mrb[0].mxu0
    %1504 = vmatprep.mubr.f32.mxu0 0.0
    %v1505 = vand.u32 %v1237, 4294901760
    %v1506 = vsub.f32 %v1237, %v1505
    %1507 = vmatmul.mubr.f32.gmra.mrb[0].mxu0 %v1506
    %v1508 = vpop.f32.mrb[0].mxu0
    %v1509 = vadd.f32 %v1422, %v1508
    %v1510 = vpop.f32.mrb[0].mxu0
    %1511 = vdwg.mxu0
    %1512 = vmatprep.subr.mxu0 0.0
    %v1513 = vand.u32 %v43, 4294901760
    %1514 = vmatpush1.msra.mxu0 %v1513
    %1515 = vmatprep.subr.mxu0 0.0
    %v1516 = vand.u32 %v44, 4294901760
    %1517 = vmatpush1.msra.mxu0 %v1516
    %1518 = vmatprep.subr.mxu0 0.0
    %v1519 = vand.u32 %v45, 4294901760
    %1520 = vmatpush1.msra.mxu0 %v1519
    %1521 = vmatprep.subr.mxu0 0.0
    %v1522 = vand.u32 %v46, 4294901760
    %1523 = vmatpush1.msra.mxu0 %v1522
    %1524 = vmatprep.subr.mxu0 0.0
    %1525 = vmatpush1.msra.mxu0 0.0
    %1526 = vmatprep.subr.mxu0 0.0
    %1527 = vmatpush1.msra.mxu0 0.0
    %1528 = vmatprep.subr.mxu0 0.0
    %1529 = vmatpush1.msra.mxu0 0.0
    %1530 = vmatprep.subr.mxu0 0.0
    %1531 = vmatpush1.msra.mxu0 0.0
    %1532 = vmatprep.subr.mxu0 0.0
    %1533 = vmatpush1.msra.mxu0 0.0
    %1534 = vmatprep.subr.mxu0 0.0
    %1535 = vmatpush1.msra.mxu0 0.0
    %1536 = vmatprep.subr.mxu0 0.0
    %1537 = vmatpush1.msra.mxu0 0.0
    %1538 = vmatprep.subr.mxu0 0.0
    %1539 = vmatpush1.msra.mxu0 0.0
    %1540 = vmatprep.subr.mxu0 0.0
    %1541 = vmatpush1.msra.mxu0 0.0
    %1542 = vmatprep.subr.mxu0 0.0
    %1543 = vmatpush1.msra.mxu0 0.0
    %1544 = vmatprep.subr.mxu0 0.0
    %1545 = vmatpush1.msra.mxu0 0.0
    %1546 = vmatprep.subr.mxu0 0.0
    %1547 = vmatpush1.msra.mxu0 0.0
    %1548 = vmatprep.subr.mxu0 0.0
    %1549 = vmatpush1.msra.mxu0 0.0
    %1550 = vmatprep.subr.mxu0 0.0
    %1551 = vmatpush1.msra.mxu0 0.0
    %1552 = vmatprep.subr.mxu0 0.0
    %1553 = vmatpush1.msra.mxu0 0.0
    %1554 = vmatprep.subr.mxu0 0.0
    %1555 = vmatpush1.msra.mxu0 0.0
    %1556 = vmatprep.subr.mxu0 0.0
    %1557 = vmatpush1.msra.mxu0 0.0
    %1558 = vmatprep.subr.mxu0 0.0
    %1559 = vmatpush1.msra.mxu0 0.0
    %1560 = vmatprep.subr.mxu0 0.0
    %1561 = vmatpush1.msra.mxu0 0.0
    %1562 = vmatprep.subr.mxu0 0.0
    %1563 = vmatpush1.msra.mxu0 0.0
    %1564 = vmatprep.subr.mxu0 0.0
    %1565 = vmatpush1.msra.mxu0 0.0
    %1566 = vmatprep.subr.mxu0 0.0
    %1567 = vmatpush1.msra.mxu0 0.0
    %1568 = vmatprep.subr.mxu0 0.0
    %1569 = vmatpush1.msra.mxu0 0.0
    %1570 = vmatprep.subr.mxu0 0.0
    %1571 = vmatpush1.msra.mxu0 0.0
    %1572 = vmatprep.subr.mxu0 0.0
    %1573 = vmatpush1.msra.mxu0 0.0
    %1574 = vmatprep.subr.mxu0 0.0
    %1575 = vmatpush1.msra.mxu0 0.0
    %1576 = vmatprep.subr.mxu0 0.0
    %1577 = vmatpush1.msra.mxu0 0.0
    %1578 = vmatprep.subr.mxu0 0.0
    %1579 = vmatpush1.msra.mxu0 0.0
    %1580 = vmatprep.mubr.f32.mxu0 0.0
    %v1581 = vand.u32 %v1234, 4294901760
    %v1582 = vsub.f32 %v1234, %v1581
    %v1583 = vand.u32 %v1582, 4294901760
    %1584 = vmatmul.mubr.f32.gmra.mrb[0].mxu0 %v1583
    %v1585 = vpop.f32.mrb[0].mxu0
    %v1586 = vadd.f32 %v1502, %v1585
    %v1587 = vpop.f32.mrb[0].mxu0
    %1588 = vmatprep.mubr.f32.mxu0 0.0
    %v1589 = vand.u32 %v1237, 4294901760
    %v1590 = vsub.f32 %v1237, %v1589
    %v1591 = vand.u32 %v1590, 4294901760
    %1592 = vmatmul.mubr.f32.gmra.mrb[0].mxu0 %v1591
    %v1593 = vpop.f32.mrb[0].mxu0
    %v1594 = vadd.f32 %v1509, %v1593
    %v1595 = vpop.f32.mrb[0].mxu0
    %1596 = vdwg.mxu0
    %1597 = vmatprep.subr.mxu0 0.0
    %v1598 = vand.u32 %v43, 4294901760
    %v1599 = vsub.f32 %v43, %v1598
    %v1600 = vand.u32 %v1599, 4294901760
    %1601 = vmatpush1.msra.mxu0 %v1600
    %1602 = vmatprep.subr.mxu0 0.0
    %v1603 = vand.u32 %v44, 4294901760
    %v1604 = vsub.f32 %v44, %v1603
    %v1605 = vand.u32 %v1604, 4294901760
    %1606 = vmatpush1.msra.mxu0 %v1605
    %1607 = vmatprep.subr.mxu0 0.0
    %v1608 = vand.u32 %v45, 4294901760
    %v1609 = vsub.f32 %v45, %v1608
    %v1610 = vand.u32 %v1609, 4294901760
    %1611 = vmatpush1.msra.mxu0 %v1610
    %1612 = vmatprep.subr.mxu0 0.0
    %v1613 = vand.u32 %v46, 4294901760
    %v1614 = vsub.f32 %v46, %v1613
    %v1615 = vand.u32 %v1614, 4294901760
    %1616 = vmatpush1.msra.mxu0 %v1615
    %1617 = vmatprep.subr.mxu0 0.0
    %1618 = vmatpush1.msra.mxu0 0.0
    %1619 = vmatprep.subr.mxu0 0.0
    %1620 = vmatpush1.msra.mxu0 0.0
    %1621 = vmatprep.subr.mxu0 0.0
    %1622 = vmatpush1.msra.mxu0 0.0
    %1623 = vmatprep.subr.mxu0 0.0
    %1624 = vmatpush1.msra.mxu0 0.0
    %1625 = vmatprep.subr.mxu0 0.0
    %1626 = vmatpush1.msra.mxu0 0.0
    %1627 = vmatprep.subr.mxu0 0.0
    %1628 = vmatpush1.msra.mxu0 0.0
    %1629 = vmatprep.subr.mxu0 0.0
    %1630 = vmatpush1.msra.mxu0 0.0
    %1631 = vmatprep.subr.mxu0 0.0
    %1632 = vmatpush1.msra.mxu0 0.0
    %1633 = vmatprep.subr.mxu0 0.0
    %1634 = vmatpush1.msra.mxu0 0.0
    %1635 = vmatprep.subr.mxu0 0.0
    %1636 = vmatpush1.msra.mxu0 0.0
    %1637 = vmatprep.subr.mxu0 0.0
    %1638 = vmatpush1.msra.mxu0 0.0
    %1639 = vmatprep.subr.mxu0 0.0
    %1640 = vmatpush1.msra.mxu0 0.0
    %1641 = vmatprep.subr.mxu0 0.0
    %1642 = vmatpush1.msra.mxu0 0.0
    %1643 = vmatprep.subr.mxu0 0.0
    %1644 = vmatpush1.msra.mxu0 0.0
    %1645 = vmatprep.subr.mxu0 0.0
    %1646 = vmatpush1.msra.mxu0 0.0
    %1647 = vmatprep.subr.mxu0 0.0
    %1648 = vmatpush1.msra.mxu0 0.0
    %1649 = vmatprep.subr.mxu0 0.0
    %1650 = vmatpush1.msra.mxu0 0.0
    %1651 = vmatprep.subr.mxu0 0.0
    %1652 = vmatpush1.msra.mxu0 0.0
    %1653 = vmatprep.subr.mxu0 0.0
    %1654 = vmatpush1.msra.mxu0 0.0
    %1655 = vmatprep.subr.mxu0 0.0
    %1656 = vmatpush1.msra.mxu0 0.0
    %1657 = vmatprep.subr.mxu0 0.0
    %1658 = vmatpush1.msra.mxu0 0.0
    %1659 = vmatprep.subr.mxu0 0.0
    %1660 = vmatpush1.msra.mxu0 0.0
    %1661 = vmatprep.subr.mxu0 0.0
    %1662 = vmatpush1.msra.mxu0 0.0
    %1663 = vmatprep.subr.mxu0 0.0
    %1664 = vmatpush1.msra.mxu0 0.0
    %1665 = vmatprep.subr.mxu0 0.0
    %1666 = vmatpush1.msra.mxu0 0.0
    %1667 = vmatprep.subr.mxu0 0.0
    %1668 = vmatpush1.msra.mxu0 0.0
    %1669 = vmatprep.subr.mxu0 0.0
    %1670 = vmatpush1.msra.mxu0 0.0
    %1671 = vmatprep.subr.mxu0 0.0
    %1672 = vmatpush1.msra.mxu0 0.0
    %1673 = vmatprep.mubr.f32.mxu0 0.0
    %v1674 = vand.u32 %v1234, 4294901760
    %1675 = vmatmul.mubr.f32.gmra.mrb[0].mxu0 %v1674
    %v1676 = vpop.f32.mrb[0].mxu0
    %v1677 = vadd.f32 %v1586, %v1676
    %v1678 = vpop.f32.mrb[0].mxu0
    %1679 = vmatprep.mubr.f32.mxu0 0.0
    %v1680 = vand.u32 %v1237, 4294901760
    %1681 = vmatmul.mubr.f32.gmra.mrb[0].mxu0 %v1680
    %v1682 = vpop.f32.mrb[0].mxu0
    %v1683 = vadd.f32 %v1594, %v1682
    %v1684 = vpop.f32.mrb[0].mxu0
    %1685 = vdwg.mxu0
    %1686 = vmatprep.subr.mxu0 0.0
    %v1687 = vand.u32 %v43, 4294901760
    %1688 = vmatpush1.msra.mxu0 %v1687
    %1689 = vmatprep.subr.mxu0 0.0
    %v1690 = vand.u32 %v44, 4294901760
    %1691 = vmatpush1.msra.mxu0 %v1690
    %1692 = vmatprep.subr.mxu0 0.0
    %v1693 = vand.u32 %v45, 4294901760
    %1694 = vmatpush1.msra.mxu0 %v1693
    %1695 = vmatprep.subr.mxu0 0.0
    %v1696 = vand.u32 %v46, 4294901760
    %1697 = vmatpush1.msra.mxu0 %v1696
    %1698 = vmatprep.subr.mxu0 0.0
    %1699 = vmatpush1.msra.mxu0 0.0
    %1700 = vmatprep.subr.mxu0 0.0
    %1701 = vmatpush1.msra.mxu0 0.0
    %1702 = vmatprep.subr.mxu0 0.0
    %1703 = vmatpush1.msra.mxu0 0.0
    %1704 = vmatprep.subr.mxu0 0.0
    %1705 = vmatpush1.msra.mxu0 0.0
    %1706 = vmatprep.subr.mxu0 0.0
    %1707 = vmatpush1.msra.mxu0 0.0
    %1708 = vmatprep.subr.mxu0 0.0
    %1709 = vmatpush1.msra.mxu0 0.0
    %1710 = vmatprep.subr.mxu0 0.0
    %1711 = vmatpush1.msra.mxu0 0.0
    %1712 = vmatprep.subr.mxu0 0.0
    %1713 = vmatpush1.msra.mxu0 0.0
    %1714 = vmatprep.subr.mxu0 0.0
    %1715 = vmatpush1.msra.mxu0 0.0
    %1716 = vmatprep.subr.mxu0 0.0
    %1717 = vmatpush1.msra.mxu0 0.0
    %1718 = vmatprep.subr.mxu0 0.0
    %1719 = vmatpush1.msra.mxu0 0.0
    %1720 = vmatprep.subr.mxu0 0.0
    %1721 = vmatpush1.msra.mxu0 0.0
    %1722 = vmatprep.subr.mxu0 0.0
    %1723 = vmatpush1.msra.mxu0 0.0
    %1724 = vmatprep.subr.mxu0 0.0
    %1725 = vmatpush1.msra.mxu0 0.0
    %1726 = vmatprep.subr.mxu0 0.0
    %1727 = vmatpush1.msra.mxu0 0.0
    %1728 = vmatprep.subr.mxu0 0.0
    %1729 = vmatpush1.msra.mxu0 0.0
    %1730 = vmatprep.subr.mxu0 0.0
    %1731 = vmatpush1.msra.mxu0 0.0
    %1732 = vmatprep.subr.mxu0 0.0
    %1733 = vmatpush1.msra.mxu0 0.0
    %1734 = vmatprep.subr.mxu0 0.0
    %1735 = vmatpush1.msra.mxu0 0.0
    %1736 = vmatprep.subr.mxu0 0.0
    %1737 = vmatpush1.msra.mxu0 0.0
    %1738 = vmatprep.subr.mxu0 0.0
    %1739 = vmatpush1.msra.mxu0 0.0
    %1740 = vmatprep.subr.mxu0 0.0
    %1741 = vmatpush1.msra.mxu0 0.0
    %1742 = vmatprep.subr.mxu0 0.0
    %1743 = vmatpush1.msra.mxu0 0.0
    %1744 = vmatprep.subr.mxu0 0.0
    %1745 = vmatpush1.msra.mxu0 0.0
    %1746 = vmatprep.subr.mxu0 0.0
    %1747 = vmatpush1.msra.mxu0 0.0
    %1748 = vmatprep.subr.mxu0 0.0
    %1749 = vmatpush1.msra.mxu0 0.0
    %1750 = vmatprep.subr.mxu0 0.0
    %1751 = vmatpush1.msra.mxu0 0.0
    %1752 = vmatprep.subr.mxu0 0.0
    %1753 = vmatpush1.msra.mxu0 0.0
    %1754 = vmatprep.mubr.f32.mxu0 0.0
    %v1755 = vand.u32 %v1234, 4294901760
    %1756 = vmatmul.mubr.f32.gmra.mrb[0].mxu0 %v1755
    %v1757 = vpop.f32.mrb[0].mxu0
    %v1758 = vadd.f32 %v1677, %v1757
    %v1759 = vpop.f32.mrb[0].mxu0
    %1760 = vmatprep.mubr.f32.mxu0 0.0
    %v1761 = vand.u32 %v1237, 4294901760
    %1762 = vmatmul.mubr.f32.gmra.mrb[0].mxu0 %v1761
    %v1763 = vpop.f32.mrb[0].mxu0
    %v1764 = vadd.f32 %v1683, %v1763
    %v1765 = vpop.f32.mrb[0].mxu0
    %1766 = vdwg.mxu0
    %v1768 = vsel %vm140, %v57, 0
    %v1771 = vsel %vm140, %v58, 0
    %1773 = vmatprep.subr.mxu0 0.0
    %v1774 = vand.u32 %v47, 4294901760
    %1775 = vmatpush1.msra.mxu0 %v1774
    %1776 = vmatprep.subr.mxu0 0.0
    %v1777 = vand.u32 %v48, 4294901760
    %1778 = vmatpush1.msra.mxu0 %v1777
    %1779 = vmatprep.subr.mxu0 0.0
    %v1780 = vand.u32 %v49, 4294901760
    %1781 = vmatpush1.msra.mxu0 %v1780
    %1782 = vmatprep.subr.mxu0 0.0
    %v1783 = vand.u32 %v50, 4294901760
    %1784 = vmatpush1.msra.mxu0 %v1783
    %1785 = vmatprep.subr.mxu0 0.0
    %1786 = vmatpush1.msra.mxu0 0.0
    %1787 = vmatprep.subr.mxu0 0.0
    %1788 = vmatpush1.msra.mxu0 0.0
    %1789 = vmatprep.subr.mxu0 0.0
    %1790 = vmatpush1.msra.mxu0 0.0
    %1791 = vmatprep.subr.mxu0 0.0
    %1792 = vmatpush1.msra.mxu0 0.0
    %1793 = vmatprep.subr.mxu0 0.0
    %1794 = vmatpush1.msra.mxu0 0.0
    %1795 = vmatprep.subr.mxu0 0.0
    %1796 = vmatpush1.msra.mxu0 0.0
    %1797 = vmatprep.subr.mxu0 0.0
    %1798 = vmatpush1.msra.mxu0 0.0
    %1799 = vmatprep.subr.mxu0 0.0
    %1800 = vmatpush1.msra.mxu0 0.0
    %1801 = vmatprep.subr.mxu0 0.0
    %1802 = vmatpush1.msra.mxu0 0.0
    %1803 = vmatprep.subr.mxu0 0.0
    %1804 = vmatpush1.msra.mxu0 0.0
    %1805 = vmatprep.subr.mxu0 0.0
    %1806 = vmatpush1.msra.mxu0 0.0
    %1807 = vmatprep.subr.mxu0 0.0
    %1808 = vmatpush1.msra.mxu0 0.0
    %1809 = vmatprep.subr.mxu0 0.0
    %1810 = vmatpush1.msra.mxu0 0.0
    %1811 = vmatprep.subr.mxu0 0.0
    %1812 = vmatpush1.msra.mxu0 0.0
    %1813 = vmatprep.subr.mxu0 0.0
    %1814 = vmatpush1.msra.mxu0 0.0
    %1815 = vmatprep.subr.mxu0 0.0
    %1816 = vmatpush1.msra.mxu0 0.0
    %1817 = vmatprep.subr.mxu0 0.0
    %1818 = vmatpush1.msra.mxu0 0.0
    %1819 = vmatprep.subr.mxu0 0.0
    %1820 = vmatpush1.msra.mxu0 0.0
    %1821 = vmatprep.subr.mxu0 0.0
    %1822 = vmatpush1.msra.mxu0 0.0
    %1823 = vmatprep.subr.mxu0 0.0
    %1824 = vmatpush1.msra.mxu0 0.0
    %1825 = vmatprep.subr.mxu0 0.0
    %1826 = vmatpush1.msra.mxu0 0.0
    %1827 = vmatprep.subr.mxu0 0.0
    %1828 = vmatpush1.msra.mxu0 0.0
    %1829 = vmatprep.subr.mxu0 0.0
    %1830 = vmatpush1.msra.mxu0 0.0
    %1831 = vmatprep.subr.mxu0 0.0
    %1832 = vmatpush1.msra.mxu0 0.0
    %1833 = vmatprep.subr.mxu0 0.0
    %1834 = vmatpush1.msra.mxu0 0.0
    %1835 = vmatprep.subr.mxu0 0.0
    %1836 = vmatpush1.msra.mxu0 0.0
    %1837 = vmatprep.subr.mxu0 0.0
    %1838 = vmatpush1.msra.mxu0 0.0
    %1839 = vmatprep.subr.mxu0 0.0
    %1840 = vmatpush1.msra.mxu0 0.0
    %1841 = vmatprep.mubr.f32.mxu0 0.0
    %v1842 = vand.u32 %v1768, 4294901760
    %v1843 = vsub.f32 %v1768, %v1842
    %v1844 = vand.u32 %v1843, 4294901760
    %v1845 = vsub.f32 %v1843, %v1844
    %v1846 = vand.u32 %v1845, 4294901760
    %1847 = vmatmul.mubr.f32.gmra.mrb[0].mxu0 %v1846
    %v1848 = vpop.f32.mrb[0].mxu0
    %v1849 = vadd.f32 0.0, %v1848
    %v1850 = vpop.f32.mrb[0].mxu0
    %1851 = vmatprep.mubr.f32.mxu0 0.0
    %v1852 = vand.u32 %v1771, 4294901760
    %v1853 = vsub.f32 %v1771, %v1852
    %v1854 = vand.u32 %v1853, 4294901760
    %v1855 = vsub.f32 %v1853, %v1854
    %v1856 = vand.u32 %v1855, 4294901760
    %1857 = vmatmul.mubr.f32.gmra.mrb[0].mxu0 %v1856
    %v1858 = vpop.f32.mrb[0].mxu0
    %v1859 = vadd.f32 0.0, %v1858
    %v1860 = vpop.f32.mrb[0].mxu0
    %1861 = vdwg.mxu0
    %1862 = vmatprep.subr.mxu0 0.0
    %v1863 = vand.u32 %v47, 4294901760
    %v1864 = vsub.f32 %v47, %v1863
    %v1865 = vand.u32 %v1864, 4294901760
    %v1866 = vsub.f32 %v1864, %v1865
    %v1867 = vand.u32 %v1866, 4294901760
    %1868 = vmatpush1.msra.mxu0 %v1867
    %1869 = vmatprep.subr.mxu0 0.0
    %v1870 = vand.u32 %v48, 4294901760
    %v1871 = vsub.f32 %v48, %v1870
    %v1872 = vand.u32 %v1871, 4294901760
    %v1873 = vsub.f32 %v1871, %v1872
    %v1874 = vand.u32 %v1873, 4294901760
    %1875 = vmatpush1.msra.mxu0 %v1874
    %1876 = vmatprep.subr.mxu0 0.0
    %v1877 = vand.u32 %v49, 4294901760
    %v1878 = vsub.f32 %v49, %v1877
    %v1879 = vand.u32 %v1878, 4294901760
    %v1880 = vsub.f32 %v1878, %v1879
    %v1881 = vand.u32 %v1880, 4294901760
    %1882 = vmatpush1.msra.mxu0 %v1881
    %1883 = vmatprep.subr.mxu0 0.0
    %v1884 = vand.u32 %v50, 4294901760
    %v1885 = vsub.f32 %v50, %v1884
    %v1886 = vand.u32 %v1885, 4294901760
    %v1887 = vsub.f32 %v1885, %v1886
    %v1888 = vand.u32 %v1887, 4294901760
    %1889 = vmatpush1.msra.mxu0 %v1888
    %1890 = vmatprep.subr.mxu0 0.0
    %1891 = vmatpush1.msra.mxu0 0.0
    %1892 = vmatprep.subr.mxu0 0.0
    %1893 = vmatpush1.msra.mxu0 0.0
    %1894 = vmatprep.subr.mxu0 0.0
    %1895 = vmatpush1.msra.mxu0 0.0
    %1896 = vmatprep.subr.mxu0 0.0
    %1897 = vmatpush1.msra.mxu0 0.0
    %1898 = vmatprep.subr.mxu0 0.0
    %1899 = vmatpush1.msra.mxu0 0.0
    %1900 = vmatprep.subr.mxu0 0.0
    %1901 = vmatpush1.msra.mxu0 0.0
    %1902 = vmatprep.subr.mxu0 0.0
    %1903 = vmatpush1.msra.mxu0 0.0
    %1904 = vmatprep.subr.mxu0 0.0
    %1905 = vmatpush1.msra.mxu0 0.0
    %1906 = vmatprep.subr.mxu0 0.0
    %1907 = vmatpush1.msra.mxu0 0.0
    %1908 = vmatprep.subr.mxu0 0.0
    %1909 = vmatpush1.msra.mxu0 0.0
    %1910 = vmatprep.subr.mxu0 0.0
    %1911 = vmatpush1.msra.mxu0 0.0
    %1912 = vmatprep.subr.mxu0 0.0
    %1913 = vmatpush1.msra.mxu0 0.0
    %1914 = vmatprep.subr.mxu0 0.0
    %1915 = vmatpush1.msra.mxu0 0.0
    %1916 = vmatprep.subr.mxu0 0.0
    %1917 = vmatpush1.msra.mxu0 0.0
    %1918 = vmatprep.subr.mxu0 0.0
    %1919 = vmatpush1.msra.mxu0 0.0
    %1920 = vmatprep.subr.mxu0 0.0
    %1921 = vmatpush1.msra.mxu0 0.0
    %1922 = vmatprep.subr.mxu0 0.0
    %1923 = vmatpush1.msra.mxu0 0.0
    %1924 = vmatprep.subr.mxu0 0.0
    %1925 = vmatpush1.msra.mxu0 0.0
    %1926 = vmatprep.subr.mxu0 0.0
    %1927 = vmatpush1.msra.mxu0 0.0
    %1928 = vmatprep.subr.mxu0 0.0
    %1929 = vmatpush1.msra.mxu0 0.0
    %1930 = vmatprep.subr.mxu0 0.0
    %1931 = vmatpush1.msra.mxu0 0.0
    %1932 = vmatprep.subr.mxu0 0.0
    %1933 = vmatpush1.msra.mxu0 0.0
    %1934 = vmatprep.subr.mxu0 0.0
    %1935 = vmatpush1.msra.mxu0 0.0
    %1936 = vmatprep.subr.mxu0 0.0
    %1937 = vmatpush1.msra.mxu0 0.0
    %1938 = vmatprep.subr.mxu0 0.0
    %1939 = vmatpush1.msra.mxu0 0.0
    %1940 = vmatprep.subr.mxu0 0.0
    %1941 = vmatpush1.msra.mxu0 0.0
    %1942 = vmatprep.subr.mxu0 0.0
    %1943 = vmatpush1.msra.mxu0 0.0
    %1944 = vmatprep.subr.mxu0 0.0
    %1945 = vmatpush1.msra.mxu0 0.0
    %1946 = vmatprep.mubr.f32.mxu0 0.0
    %v1947 = vand.u32 %v1768, 4294901760
    %1948 = vmatmul.mubr.f32.gmra.mrb[0].mxu0 %v1947
    %v1949 = vpop.f32.mrb[0].mxu0
    %v1950 = vadd.f32 %v1849, %v1949
    %v1951 = vpop.f32.mrb[0].mxu0
    %1952 = vmatprep.mubr.f32.mxu0 0.0
    %v1953 = vand.u32 %v1771, 4294901760
    %1954 = vmatmul.mubr.f32.gmra.mrb[0].mxu0 %v1953
    %v1955 = vpop.f32.mrb[0].mxu0
    %v1956 = vadd.f32 %v1859, %v1955
    %v1957 = vpop.f32.mrb[0].mxu0
    %1958 = vdwg.mxu0
    %1959 = vmatprep.subr.mxu0 0.0
    %v1960 = vand.u32 %v47, 4294901760
    %v1961 = vsub.f32 %v47, %v1960
    %1962 = vmatpush1.msra.mxu0 %v1961
    %1963 = vmatprep.subr.mxu0 0.0
    %v1964 = vand.u32 %v48, 4294901760
    %v1965 = vsub.f32 %v48, %v1964
    %1966 = vmatpush1.msra.mxu0 %v1965
    %1967 = vmatprep.subr.mxu0 0.0
    %v1968 = vand.u32 %v49, 4294901760
    %v1969 = vsub.f32 %v49, %v1968
    %1970 = vmatpush1.msra.mxu0 %v1969
    %1971 = vmatprep.subr.mxu0 0.0
    %v1972 = vand.u32 %v50, 4294901760
    %v1973 = vsub.f32 %v50, %v1972
    %1974 = vmatpush1.msra.mxu0 %v1973
    %1975 = vmatprep.subr.mxu0 0.0
    %1976 = vmatpush1.msra.mxu0 0.0
    %1977 = vmatprep.subr.mxu0 0.0
    %1978 = vmatpush1.msra.mxu0 0.0
    %1979 = vmatprep.subr.mxu0 0.0
    %1980 = vmatpush1.msra.mxu0 0.0
    %1981 = vmatprep.subr.mxu0 0.0
    %1982 = vmatpush1.msra.mxu0 0.0
    %1983 = vmatprep.subr.mxu0 0.0
    %1984 = vmatpush1.msra.mxu0 0.0
    %1985 = vmatprep.subr.mxu0 0.0
    %1986 = vmatpush1.msra.mxu0 0.0
    %1987 = vmatprep.subr.mxu0 0.0
    %1988 = vmatpush1.msra.mxu0 0.0
    %1989 = vmatprep.subr.mxu0 0.0
    %1990 = vmatpush1.msra.mxu0 0.0
    %1991 = vmatprep.subr.mxu0 0.0
    %1992 = vmatpush1.msra.mxu0 0.0
    %1993 = vmatprep.subr.mxu0 0.0
    %1994 = vmatpush1.msra.mxu0 0.0
    %1995 = vmatprep.subr.mxu0 0.0
    %1996 = vmatpush1.msra.mxu0 0.0
    %1997 = vmatprep.subr.mxu0 0.0
    %1998 = vmatpush1.msra.mxu0 0.0
    %1999 = vmatprep.subr.mxu0 0.0
    %2000 = vmatpush1.msra.mxu0 0.0
    %2001 = vmatprep.subr.mxu0 0.0
    %2002 = vmatpush1.msra.mxu0 0.0
    %2003 = vmatprep.subr.mxu0 0.0
    %2004 = vmatpush1.msra.mxu0 0.0
    %2005 = vmatprep.subr.mxu0 0.0
    %2006 = vmatpush1.msra.mxu0 0.0
    %2007 = vmatprep.subr.mxu0 0.0
    %2008 = vmatpush1.msra.mxu0 0.0
    %2009 = vmatprep.subr.mxu0 0.0
    %2010 = vmatpush1.msra.mxu0 0.0
    %2011 = vmatprep.subr.mxu0 0.0
    %2012 = vmatpush1.msra.mxu0 0.0
    %2013 = vmatprep.subr.mxu0 0.0
    %2014 = vmatpush1.msra.mxu0 0.0
    %2015 = vmatprep.subr.mxu0 0.0
    %2016 = vmatpush1.msra.mxu0 0.0
    %2017 = vmatprep.subr.mxu0 0.0
    %2018 = vmatpush1.msra.mxu0 0.0
    %2019 = vmatprep.subr.mxu0 0.0
    %2020 = vmatpush1.msra.mxu0 0.0
    %2021 = vmatprep.subr.mxu0 0.0
    %2022 = vmatpush1.msra.mxu0 0.0
    %2023 = vmatprep.subr.mxu0 0.0
    %2024 = vmatpush1.msra.mxu0 0.0
    %2025 = vmatprep.subr.mxu0 0.0
    %2026 = vmatpush1.msra.mxu0 0.0
    %2027 = vmatprep.subr.mxu0 0.0
    %2028 = vmatpush1.msra.mxu0 0.0
    %2029 = vmatprep.subr.mxu0 0.0
    %2030 = vmatpush1.msra.mxu0 0.0
    %2031 = vmatprep.mubr.f32.mxu0 0.0
    %v2032 = vand.u32 %v1768, 4294901760
    %v2033 = vsub.f32 %v1768, %v2032
    %2034 = vmatmul.mubr.f32.gmra.mrb[0].mxu0 %v2033
    %v2035 = vpop.f32.mrb[0].mxu0
    %v2036 = vadd.f32 %v1950, %v2035
    %v2037 = vpop.f32.mrb[0].mxu0
    %2038 = vmatprep.mubr.f32.mxu0 0.0
    %v2039 = vand.u32 %v1771, 4294901760
    %v2040 = vsub.f32 %v1771, %v2039
    %2041 = vmatmul.mubr.f32.gmra.mrb[0].mxu0 %v2040
    %v2042 = vpop.f32.mrb[0].mxu0
    %v2043 = vadd.f32 %v1956, %v2042
    %v2044 = vpop.f32.mrb[0].mxu0
    %2045 = vdwg.mxu0
    %2046 = vmatprep.subr.mxu0 0.0
    %v2047 = vand.u32 %v47, 4294901760
    %2048 = vmatpush1.msra.mxu0 %v2047
    %2049 = vmatprep.subr.mxu0 0.0
    %v2050 = vand.u32 %v48, 4294901760
    %2051 = vmatpush1.msra.mxu0 %v2050
    %2052 = vmatprep.subr.mxu0 0.0
    %v2053 = vand.u32 %v49, 4294901760
    %2054 = vmatpush1.msra.mxu0 %v2053
    %2055 = vmatprep.subr.mxu0 0.0
    %v2056 = vand.u32 %v50, 4294901760
    %2057 = vmatpush1.msra.mxu0 %v2056
    %2058 = vmatprep.subr.mxu0 0.0
    %2059 = vmatpush1.msra.mxu0 0.0
    %2060 = vmatprep.subr.mxu0 0.0
    %2061 = vmatpush1.msra.mxu0 0.0
    %2062 = vmatprep.subr.mxu0 0.0
    %2063 = vmatpush1.msra.mxu0 0.0
    %2064 = vmatprep.subr.mxu0 0.0
    %2065 = vmatpush1.msra.mxu0 0.0
    %2066 = vmatprep.subr.mxu0 0.0
    %2067 = vmatpush1.msra.mxu0 0.0
    %2068 = vmatprep.subr.mxu0 0.0
    %2069 = vmatpush1.msra.mxu0 0.0
    %2070 = vmatprep.subr.mxu0 0.0
    %2071 = vmatpush1.msra.mxu0 0.0
    %2072 = vmatprep.subr.mxu0 0.0
    %2073 = vmatpush1.msra.mxu0 0.0
    %2074 = vmatprep.subr.mxu0 0.0
    %2075 = vmatpush1.msra.mxu0 0.0
    %2076 = vmatprep.subr.mxu0 0.0
    %2077 = vmatpush1.msra.mxu0 0.0
    %2078 = vmatprep.subr.mxu0 0.0
    %2079 = vmatpush1.msra.mxu0 0.0
    %2080 = vmatprep.subr.mxu0 0.0
    %2081 = vmatpush1.msra.mxu0 0.0
    %2082 = vmatprep.subr.mxu0 0.0
    %2083 = vmatpush1.msra.mxu0 0.0
    %2084 = vmatprep.subr.mxu0 0.0
    %2085 = vmatpush1.msra.mxu0 0.0
    %2086 = vmatprep.subr.mxu0 0.0
    %2087 = vmatpush1.msra.mxu0 0.0
    %2088 = vmatprep.subr.mxu0 0.0
    %2089 = vmatpush1.msra.mxu0 0.0
    %2090 = vmatprep.subr.mxu0 0.0
    %2091 = vmatpush1.msra.mxu0 0.0
    %2092 = vmatprep.subr.mxu0 0.0
    %2093 = vmatpush1.msra.mxu0 0.0
    %2094 = vmatprep.subr.mxu0 0.0
    %2095 = vmatpush1.msra.mxu0 0.0
    %2096 = vmatprep.subr.mxu0 0.0
    %2097 = vmatpush1.msra.mxu0 0.0
    %2098 = vmatprep.subr.mxu0 0.0
    %2099 = vmatpush1.msra.mxu0 0.0
    %2100 = vmatprep.subr.mxu0 0.0
    %2101 = vmatpush1.msra.mxu0 0.0
    %2102 = vmatprep.subr.mxu0 0.0
    %2103 = vmatpush1.msra.mxu0 0.0
    %2104 = vmatprep.subr.mxu0 0.0
    %2105 = vmatpush1.msra.mxu0 0.0
    %2106 = vmatprep.subr.mxu0 0.0
    %2107 = vmatpush1.msra.mxu0 0.0
    %2108 = vmatprep.subr.mxu0 0.0
    %2109 = vmatpush1.msra.mxu0 0.0
    %2110 = vmatprep.subr.mxu0 0.0
    %2111 = vmatpush1.msra.mxu0 0.0
    %2112 = vmatprep.subr.mxu0 0.0
    %2113 = vmatpush1.msra.mxu0 0.0
    %2114 = vmatprep.mubr.f32.mxu0 0.0
    %v2115 = vand.u32 %v1768, 4294901760
    %v2116 = vsub.f32 %v1768, %v2115
    %v2117 = vand.u32 %v2116, 4294901760
    %2118 = vmatmul.mubr.f32.gmra.mrb[0].mxu0 %v2117
    %v2119 = vpop.f32.mrb[0].mxu0
    %v2120 = vadd.f32 %v2036, %v2119
    %v2121 = vpop.f32.mrb[0].mxu0
    %2122 = vmatprep.mubr.f32.mxu0 0.0
    %v2123 = vand.u32 %v1771, 4294901760
    %v2124 = vsub.f32 %v1771, %v2123
    %v2125 = vand.u32 %v2124, 4294901760
    %2126 = vmatmul.mubr.f32.gmra.mrb[0].mxu0 %v2125
    %v2127 = vpop.f32.mrb[0].mxu0
    %v2128 = vadd.f32 %v2043, %v2127
    %v2129 = vpop.f32.mrb[0].mxu0
    %2130 = vdwg.mxu0
    %2131 = vmatprep.subr.mxu0 0.0
    %v2132 = vand.u32 %v47, 4294901760
    %v2133 = vsub.f32 %v47, %v2132
    %v2134 = vand.u32 %v2133, 4294901760
    %2135 = vmatpush1.msra.mxu0 %v2134
    %2136 = vmatprep.subr.mxu0 0.0
    %v2137 = vand.u32 %v48, 4294901760
    %v2138 = vsub.f32 %v48, %v2137
    %v2139 = vand.u32 %v2138, 4294901760
    %2140 = vmatpush1.msra.mxu0 %v2139
    %2141 = vmatprep.subr.mxu0 0.0
    %v2142 = vand.u32 %v49, 4294901760
    %v2143 = vsub.f32 %v49, %v2142
    %v2144 = vand.u32 %v2143, 4294901760
    %2145 = vmatpush1.msra.mxu0 %v2144
    %2146 = vmatprep.subr.mxu0 0.0
    %v2147 = vand.u32 %v50, 4294901760
    %v2148 = vsub.f32 %v50, %v2147
    %v2149 = vand.u32 %v2148, 4294901760
    %2150 = vmatpush1.msra.mxu0 %v2149
    %2151 = vmatprep.subr.mxu0 0.0
    %2152 = vmatpush1.msra.mxu0 0.0
    %2153 = vmatprep.subr.mxu0 0.0
    %2154 = vmatpush1.msra.mxu0 0.0
    %2155 = vmatprep.subr.mxu0 0.0
    %2156 = vmatpush1.msra.mxu0 0.0
    %2157 = vmatprep.subr.mxu0 0.0
    %2158 = vmatpush1.msra.mxu0 0.0
    %2159 = vmatprep.subr.mxu0 0.0
    %2160 = vmatpush1.msra.mxu0 0.0
    %2161 = vmatprep.subr.mxu0 0.0
    %2162 = vmatpush1.msra.mxu0 0.0
    %2163 = vmatprep.subr.mxu0 0.0
    %2164 = vmatpush1.msra.mxu0 0.0
    %2165 = vmatprep.subr.mxu0 0.0
    %2166 = vmatpush1.msra.mxu0 0.0
    %2167 = vmatprep.subr.mxu0 0.0
    %2168 = vmatpush1.msra.mxu0 0.0
    %2169 = vmatprep.subr.mxu0 0.0
    %2170 = vmatpush1.msra.mxu0 0.0
    %2171 = vmatprep.subr.mxu0 0.0
    %2172 = vmatpush1.msra.mxu0 0.0
    %2173 = vmatprep.subr.mxu0 0.0
    %2174 = vmatpush1.msra.mxu0 0.0
    %2175 = vmatprep.subr.mxu0 0.0
    %2176 = vmatpush1.msra.mxu0 0.0
    %2177 = vmatprep.subr.mxu0 0.0
    %2178 = vmatpush1.msra.mxu0 0.0
    %2179 = vmatprep.subr.mxu0 0.0
    %2180 = vmatpush1.msra.mxu0 0.0
    %2181 = vmatprep.subr.mxu0 0.0
    %2182 = vmatpush1.msra.mxu0 0.0
    %2183 = vmatprep.subr.mxu0 0.0
    %2184 = vmatpush1.msra.mxu0 0.0
    %2185 = vmatprep.subr.mxu0 0.0
    %2186 = vmatpush1.msra.mxu0 0.0
    %2187 = vmatprep.subr.mxu0 0.0
    %2188 = vmatpush1.msra.mxu0 0.0
    %2189 = vmatprep.subr.mxu0 0.0
    %2190 = vmatpush1.msra.mxu0 0.0
    %2191 = vmatprep.subr.mxu0 0.0
    %2192 = vmatpush1.msra.mxu0 0.0
    %2193 = vmatprep.subr.mxu0 0.0
    %2194 = vmatpush1.msra.mxu0 0.0
    %2195 = vmatprep.subr.mxu0 0.0
    %2196 = vmatpush1.msra.mxu0 0.0
    %2197 = vmatprep.subr.mxu0 0.0
    %2198 = vmatpush1.msra.mxu0 0.0
    %2199 = vmatprep.subr.mxu0 0.0
    %2200 = vmatpush1.msra.mxu0 0.0
    %2201 = vmatprep.subr.mxu0 0.0
    %2202 = vmatpush1.msra.mxu0 0.0
    %2203 = vmatprep.subr.mxu0 0.0
    %2204 = vmatpush1.msra.mxu0 0.0
    %2205 = vmatprep.subr.mxu0 0.0
    %2206 = vmatpush1.msra.mxu0 0.0
    %2207 = vmatprep.mubr.f32.mxu0 0.0
    %v2208 = vand.u32 %v1768, 4294901760
    %2209 = vmatmul.mubr.f32.gmra.mrb[0].mxu0 %v2208
    %v2210 = vpop.f32.mrb[0].mxu0
    %v2211 = vadd.f32 %v2120, %v2210
    %v2212 = vpop.f32.mrb[0].mxu0
    %2213 = vmatprep.mubr.f32.mxu0 0.0
    %v2214 = vand.u32 %v1771, 4294901760
    %2215 = vmatmul.mubr.f32.gmra.mrb[0].mxu0 %v2214
    %v2216 = vpop.f32.mrb[0].mxu0
    %v2217 = vadd.f32 %v2128, %v2216
    %v2218 = vpop.f32.mrb[0].mxu0
    %2219 = vdwg.mxu0
    %2220 = vmatprep.subr.mxu0 0.0
    %v2221 = vand.u32 %v47, 4294901760
    %2222 = vmatpush1.msra.mxu0 %v2221
    %2223 = vmatprep.subr.mxu0 0.0
    %v2224 = vand.u32 %v48, 4294901760
    %2225 = vmatpush1.msra.mxu0 %v2224
    %2226 = vmatprep.subr.mxu0 0.0
    %v2227 = vand.u32 %v49, 4294901760
    %2228 = vmatpush1.msra.mxu0 %v2227
    %2229 = vmatprep.subr.mxu0 0.0
    %v2230 = vand.u32 %v50, 4294901760
    %2231 = vmatpush1.msra.mxu0 %v2230
    %2232 = vmatprep.subr.mxu0 0.0
    %2233 = vmatpush1.msra.mxu0 0.0
    %2234 = vmatprep.subr.mxu0 0.0
    %2235 = vmatpush1.msra.mxu0 0.0
    %2236 = vmatprep.subr.mxu0 0.0
    %2237 = vmatpush1.msra.mxu0 0.0
    %2238 = vmatprep.subr.mxu0 0.0
    %2239 = vmatpush1.msra.mxu0 0.0
    %2240 = vmatprep.subr.mxu0 0.0
    %2241 = vmatpush1.msra.mxu0 0.0
    %2242 = vmatprep.subr.mxu0 0.0
    %2243 = vmatpush1.msra.mxu0 0.0
    %2244 = vmatprep.subr.mxu0 0.0
    %2245 = vmatpush1.msra.mxu0 0.0
    %2246 = vmatprep.subr.mxu0 0.0
    %2247 = vmatpush1.msra.mxu0 0.0
    %2248 = vmatprep.subr.mxu0 0.0
    %2249 = vmatpush1.msra.mxu0 0.0
    %2250 = vmatprep.subr.mxu0 0.0
    %2251 = vmatpush1.msra.mxu0 0.0
    %2252 = vmatprep.subr.mxu0 0.0
    %2253 = vmatpush1.msra.mxu0 0.0
    %2254 = vmatprep.subr.mxu0 0.0
    %2255 = vmatpush1.msra.mxu0 0.0
    %2256 = vmatprep.subr.mxu0 0.0
    %2257 = vmatpush1.msra.mxu0 0.0
    %2258 = vmatprep.subr.mxu0 0.0
    %2259 = vmatpush1.msra.mxu0 0.0
    %2260 = vmatprep.subr.mxu0 0.0
    %2261 = vmatpush1.msra.mxu0 0.0
    %2262 = vmatprep.subr.mxu0 0.0
    %2263 = vmatpush1.msra.mxu0 0.0
    %2264 = vmatprep.subr.mxu0 0.0
    %2265 = vmatpush1.msra.mxu0 0.0
    %2266 = vmatprep.subr.mxu0 0.0
    %2267 = vmatpush1.msra.mxu0 0.0
    %2268 = vmatprep.subr.mxu0 0.0
    %2269 = vmatpush1.msra.mxu0 0.0
    %2270 = vmatprep.subr.mxu0 0.0
    %2271 = vmatpush1.msra.mxu0 0.0
    %2272 = vmatprep.subr.mxu0 0.0
    %2273 = vmatpush1.msra.mxu0 0.0
    %2274 = vmatprep.subr.mxu0 0.0
    %2275 = vmatpush1.msra.mxu0 0.0
    %2276 = vmatprep.subr.mxu0 0.0
    %2277 = vmatpush1.msra.mxu0 0.0
    %2278 = vmatprep.subr.mxu0 0.0
    %2279 = vmatpush1.msra.mxu0 0.0
    %2280 = vmatprep.subr.mxu0 0.0
    %2281 = vmatpush1.msra.mxu0 0.0
    %2282 = vmatprep.subr.mxu0 0.0
    %2283 = vmatpush1.msra.mxu0 0.0
    %2284 = vmatprep.subr.mxu0 0.0
    %2285 = vmatpush1.msra.mxu0 0.0
    %2286 = vmatprep.subr.mxu0 0.0
    %2287 = vmatpush1.msra.mxu0 0.0
    %2288 = vmatprep.mubr.f32.mxu0 0.0
    %v2289 = vand.u32 %v1768, 4294901760
    %2290 = vmatmul.mubr.f32.gmra.mrb[0].mxu0 %v2289
    %v2291 = vpop.f32.mrb[0].mxu0
    %v2292 = vadd.f32 %v2211, %v2291
    %v2293 = vpop.f32.mrb[0].mxu0
    %2294 = vmatprep.mubr.f32.mxu0 0.0
    %v2295 = vand.u32 %v1771, 4294901760
    %2296 = vmatmul.mubr.f32.gmra.mrb[0].mxu0 %v2295
    %v2297 = vpop.f32.mrb[0].mxu0
    %v2298 = vadd.f32 %v2217, %v2297
    %v2299 = vpop.f32.mrb[0].mxu0
    %2300 = vdwg.mxu0
    %v2301 = vadd.f32 %v143, %v92
    %v2302 = vadd.f32 %v146, %v92
    %v2303 = vadd.f32 %v149, %v105
    %v2304 = vadd.f32 %v152, %v105
    %v2305 = vadd.f32 %v155, %v118
    %v2306 = vadd.f32 %v158, %v118
    %v2307 = vadd.f32 %v161, %v131
    %v2308 = vadd.f32 %v164, %v131
    %v2309 = vmul.f32 %v690, 2.0
    %v2310 = vmul.f32 %v696, 2.0
    %v2311 = vmul.f32 %v1224, 2.0
    %v2312 = vmul.f32 %v1230, 2.0
    %v2313 = vmul.f32 %v1758, 2.0
    %v2314 = vmul.f32 %v1764, 2.0
    %v2315 = vmul.f32 %v2292, 2.0
    %v2316 = vmul.f32 %v2298, 2.0
    %v2317 = vsub.f32 %v2301, %v2309
    %v2318 = vsub.f32 %v2302, %v2310
    %v2319 = vsub.f32 %v2303, %v2311
    %v2320 = vsub.f32 %v2304, %v2312
    %v2321 = vsub.f32 %v2305, %v2313
    %v2322 = vsub.f32 %v2306, %v2314
    %v2323 = vsub.f32 %v2307, %v2315
    %v2324 = vsub.f32 %v2308, %v2316
    %v2325 = vmax.f32 %v2317, 0.0
    %v2326 = vmax.f32 %v2318, 0.0
    %v2327 = vmax.f32 %v2319, 0.0
    %v2328 = vmax.f32 %v2320, 0.0
    %v2329 = vmax.f32 %v2321, 0.0
    %v2330 = vmax.f32 %v2322, 0.0
    %v2331 = vmax.f32 %v2323, 0.0
    %v2332 = vmax.f32 %v2324, 0.0
    %v2333 = vrsqrt.pop %v2325
    %v2334 = vmul.f32 %v2325, %v2333
    %vm2335 = vcmp.eq.f32.partialorder %v2325, inf
    %v2336 = vsel %vm2335, %v2325, %v2334
    %vm2337 = vcmp.eq.f32.partialorder %v2325, 0.0
    %v2338 = vand.u32 %v2325, 2147483648
    %v2339 = vsel %vm2337, %v2338, %v2336
    %v2340 = vrsqrt.pop %v2326
    %v2341 = vmul.f32 %v2326, %v2340
    %vm2342 = vcmp.eq.f32.partialorder %v2326, inf
    %v2343 = vsel %vm2342, %v2326, %v2341
    %vm2344 = vcmp.eq.f32.partialorder %v2326, 0.0
    %v2345 = vand.u32 %v2326, 2147483648
    %v2346 = vsel %vm2344, %v2345, %v2343
    %v2347 = vrsqrt.pop %v2327
    %v2348 = vmul.f32 %v2327, %v2347
    %vm2349 = vcmp.eq.f32.partialorder %v2327, inf
    %v2350 = vsel %vm2349, %v2327, %v2348
    %vm2351 = vcmp.eq.f32.partialorder %v2327, 0.0
    %v2352 = vand.u32 %v2327, 2147483648
    %v2353 = vsel %vm2351, %v2352, %v2350
    %v2354 = vrsqrt.pop %v2328
    %v2355 = vmul.f32 %v2328, %v2354
    %vm2356 = vcmp.eq.f32.partialorder %v2328, inf
    %v2357 = vsel %vm2356, %v2328, %v2355
    %vm2358 = vcmp.eq.f32.partialorder %v2328, 0.0
    %v2359 = vand.u32 %v2328, 2147483648
    %v2360 = vsel %vm2358, %v2359, %v2357
    %v2361 = vrsqrt.pop %v2329
    %v2362 = vmul.f32 %v2329, %v2361
    %vm2363 = vcmp.eq.f32.partialorder %v2329, inf
    %v2364 = vsel %vm2363, %v2329, %v2362
    %vm2365 = vcmp.eq.f32.partialorder %v2329, 0.0
    %v2366 = vand.u32 %v2329, 2147483648
    %v2367 = vsel %vm2365, %v2366, %v2364
    %v2368 = vrsqrt.pop %v2330
    %v2369 = vmul.f32 %v2330, %v2368
    %vm2370 = vcmp.eq.f32.partialorder %v2330, inf
    %v2371 = vsel %vm2370, %v2330, %v2369
    %vm2372 = vcmp.eq.f32.partialorder %v2330, 0.0
    %v2373 = vand.u32 %v2330, 2147483648
    %v2374 = vsel %vm2372, %v2373, %v2371
    %v2375 = vrsqrt.pop %v2331
    %v2376 = vmul.f32 %v2331, %v2375
    %vm2377 = vcmp.eq.f32.partialorder %v2331, inf
    %v2378 = vsel %vm2377, %v2331, %v2376
    %vm2379 = vcmp.eq.f32.partialorder %v2331, 0.0
    %v2380 = vand.u32 %v2331, 2147483648
    %v2381 = vsel %vm2379, %v2380, %v2378
    %v2382 = vrsqrt.pop %v2332
    %v2383 = vmul.f32 %v2332, %v2382
    %vm2384 = vcmp.eq.f32.partialorder %v2332, inf
    %v2385 = vsel %vm2384, %v2332, %v2383
    %vm2386 = vcmp.eq.f32.partialorder %v2332, 0.0
    %v2387 = vand.u32 %v2332, 2147483648
    %v2388 = vsel %vm2386, %v2387, %v2385
    %v2389 = vadd.f32 %v2339, 1.0
    %v2390 = vadd.f32 %v2346, 1.0
    %v2391 = vadd.f32 %v2353, 1.0
    %v2392 = vadd.f32 %v2360, 1.0
    %v2393 = vadd.f32 %v2367, 1.0
    %v2394 = vadd.f32 %v2374, 1.0
    %v2395 = vadd.f32 %v2381, 1.0
    %v2396 = vadd.f32 %v2388, 1.0
    %v2397 = vrcp.pop %v2389
    %v2398 = vrcp.pop %v2390
    %v2399 = vrcp.pop %v2391
    %v2400 = vrcp.pop %v2392
    %v2401 = vrcp.pop %v2393
    %v2402 = vrcp.pop %v2394
    %v2403 = vrcp.pop %v2395
    %v2404 = vrcp.pop %v2396
    %v2405 = vstv %s31
    %v2406 = vmul.f32 %v2405, %v2397
    %v2407 = vmul.f32 %v2405, %v2398
    %v2408 = vmul.f32 %v2405, %v2399
    %v2409 = vmul.f32 %v2405, %v2400
    %v2410 = vmul.f32 %v2405, %v2401
    %v2411 = vmul.f32 %v2405, %v2402
    %v2412 = vmul.f32 %v2405, %v2403
    %v2413 = vmul.f32 %v2405, %v2404
    %v2414 = vstv %s32
    %v2415 = vsub.f32 %v2406, %v2414
    %v2416 = vsub.f32 %v2407, %v2414
    %v2417 = vsub.f32 %v2408, %v2414
    %v2418 = vsub.f32 %v2409, %v2414
    %v2419 = vsub.f32 %v2410, %v2414
    %v2420 = vsub.f32 %v2411, %v2414
    %v2421 = vsub.f32 %v2412, %v2414
    %v2422 = vsub.f32 %v2413, %v2414
    %v2423 = vtanh.pop %v2415
    %v2424 = vtanh.pop %v2416
    %v2425 = vtanh.pop %v2417
    %v2426 = vtanh.pop %v2418
    %v2427 = vtanh.pop %v2419
    %v2428 = vtanh.pop %v2420
    %v2429 = vtanh.pop %v2421
    %v2430 = vtanh.pop %v2422
    %v2431 = vlaneseq
    %v2432 = vshrl.u32 %v2431, 7
    %v2433 = vsub.s32 0, %v2432
    %v2434 = vrot.slane %v59, %v2433
    %2436 = vbcast.lane.b32.xlu0 %v2434, 256
    %v2437 = vpop.permute.xlu0 %2436
    %s2439 = sor.u32 256, 8
    %2440 = vbcast.lane.b32.xlu0 %v2434, %s2439
    %v2441 = vpop.permute.xlu0 %2440
    %v2442 = vlaneseq
    %v2443 = vshrl.u32 %v2442, 7
    %v2444 = vsub.s32 0, %v2443
    %v2445 = vrot.slane %v60, %v2444
    %2447 = vbcast.lane.b32.xlu0 %v2445, 256
    %v2448 = vpop.permute.xlu0 %2447
    %s2450 = sor.u32 256, 8
    %2451 = vbcast.lane.b32.xlu0 %v2445, %s2450
    %v2452 = vpop.permute.xlu0 %2451
    %v2453 = vlaneseq
    %v2454 = vshrl.u32 %v2453, 7
    %v2455 = vsub.s32 0, %v2454
    %v2456 = vrot.slane %v61, %v2455
    %2458 = vbcast.lane.b32.xlu0 %v2456, 256
    %v2459 = vpop.permute.xlu0 %2458
    %s2461 = sor.u32 256, 8
    %2462 = vbcast.lane.b32.xlu0 %v2456, %s2461
    %v2463 = vpop.permute.xlu0 %2462
    %v2464 = vlaneseq
    %v2465 = vshrl.u32 %v2464, 7
    %v2466 = vsub.s32 0, %v2465
    %v2467 = vrot.slane %v62, %v2466
    %2469 = vbcast.lane.b32.xlu0 %v2467, 256
    %v2470 = vpop.permute.xlu0 %2469
    %s2472 = sor.u32 256, 8
    %2473 = vbcast.lane.b32.xlu0 %v2467, %s2472
    %v2474 = vpop.permute.xlu0 %2473
    %v2475 = vmul.f32 %v2437, %v2423
    %v2476 = vmul.f32 %v2441, %v2424
    %v2477 = vmul.f32 %v2448, %v2425
    %v2478 = vmul.f32 %v2452, %v2426
    %v2479 = vmul.f32 %v2459, %v2427
    %v2480 = vmul.f32 %v2463, %v2428
    %v2481 = vmul.f32 %v2470, %v2429
    %v2482 = vmul.f32 %v2474, %v2430
    %v2483 = vsel %vm79, %v2475, 0.0
    %v2484 = vsel %vm79, %v2476, 0.0
    %v2485 = vadd.f32 %v2483, %v2484
    %v2486 = vrot.slane %v2485, 4
    %v2487 = vadd.f32 %v2485, %v2486
    %v2488 = vrot.slane %v2487, 2
    %v2489 = vadd.f32 %v2487, %v2488
    %v2490 = vrot.slane %v2489, 1
    %v2491 = vadd.f32 %v2489, %v2490
    %v2492 = vsel %vm79, %v2477, 0.0
    %v2493 = vsel %vm79, %v2478, 0.0
    %v2494 = vadd.f32 %v2492, %v2493
    %v2495 = vrot.slane %v2494, 4
    %v2496 = vadd.f32 %v2494, %v2495
    %v2497 = vrot.slane %v2496, 2
    %v2498 = vadd.f32 %v2496, %v2497
    %v2499 = vrot.slane %v2498, 1
    %v2500 = vadd.f32 %v2498, %v2499
    %v2501 = vsel %vm79, %v2479, 0.0
    %v2502 = vsel %vm79, %v2480, 0.0
    %v2503 = vadd.f32 %v2501, %v2502
    %v2504 = vrot.slane %v2503, 4
    %v2505 = vadd.f32 %v2503, %v2504
    %v2506 = vrot.slane %v2505, 2
    %v2507 = vadd.f32 %v2505, %v2506
    %v2508 = vrot.slane %v2507, 1
    %v2509 = vadd.f32 %v2507, %v2508
    %v2510 = vsel %vm79, %v2481, 0.0
    %v2511 = vsel %vm79, %v2482, 0.0
    %v2512 = vadd.f32 %v2510, %v2511
    %v2513 = vrot.slane %v2512, 4
    %v2514 = vadd.f32 %v2512, %v2513
    %v2515 = vrot.slane %v2514, 2
    %v2516 = vadd.f32 %v2514, %v2515
    %v2517 = vrot.slane %v2516, 1
    %v2518 = vadd.f32 %v2516, %v2517
    %2520 = vset.pattern.permute.xlu0 0
    %2521 = vperm.xlu0 %2520, %v59
    %v2522 = vpop.permute.xlu0 %2521
    %2525 = vset.pattern.permute.xlu0 0
    %2526 = vperm.xlu0 %2525, %v60
    %v2527 = vpop.permute.xlu0 %2526
    %2530 = vset.pattern.permute.xlu0 0
    %2531 = vperm.xlu0 %2530, %v61
    %v2532 = vpop.permute.xlu0 %2531
    %2535 = vset.pattern.permute.xlu0 0
    %2536 = vperm.xlu0 %2535, %v62
    %v2537 = vpop.permute.xlu0 %2536
    %v2539 = vadd.f32 %v2491, %v2522
    %v2540 = vadd.f32 %v2500, %v2527
    %v2541 = vadd.f32 %v2509, %v2532
    %v2542 = vadd.f32 %v2518, %v2537
    %v2547 = vrot.slane %v2539, 2
    %v2548 = vrot.slane %v2540, 2
    %v2549 = vrot.slane %v2541, 2
    %v2550 = vrot.slane %v2542, 2
    %v2555 = vsub.f32 %v2339, %v2547
    %v2556 = vsub.f32 %v2353, %v2548
    %v2557 = vsub.f32 %v2367, %v2549
    %v2558 = vsub.f32 %v2381, %v2550
    %v2559 = vmax.f32 %v2555, 0.0
    %v2560 = vmax.f32 %v2556, 0.0
    %v2561 = vmax.f32 %v2557, 0.0
    %v2562 = vmax.f32 %v2558, 0.0
    %v2563 = vstv %s33
    %v2564 = vmul.f32 %v2563, %v2559
    %v2565 = vmul.f32 %v2563, %v2560
    %v2566 = vmul.f32 %v2563, %v2561
    %v2567 = vmul.f32 %v2563, %v2562
    %v2568 = vmul.f32 %v2559, %v2559
    %v2569 = vmul.f32 %v2560, %v2560
    %v2570 = vmul.f32 %v2561, %v2561
    %v2571 = vmul.f32 %v2562, %v2562
    %v2572 = vstv %s34
    %v2573 = vmul.f32 %v2572, %v2568
    %v2574 = vmul.f32 %v2572, %v2569
    %v2575 = vmul.f32 %v2572, %v2570
    %v2576 = vmul.f32 %v2572, %v2571
    %v2577 = vadd.f32 %v2564, %v2573
    %v2578 = vadd.f32 %v2565, %v2574
    %v2579 = vadd.f32 %v2566, %v2575
    %v2580 = vadd.f32 %v2567, %v2576
    %v2581 = vrot.slane %v59, 1
    %v2582 = vrot.slane %v60, 1
    %v2583 = vrot.slane %v61, 1
    %v2584 = vrot.slane %v62, 1
    %v2589 = vadd.f32 %v2577, %v2581
    %v2590 = vadd.f32 %v2578, %v2582
    %v2591 = vadd.f32 %v2579, %v2583
    %v2592 = vadd.f32 %v2580, %v2584
    %v2597 = vrot.slane %v2590, 7
    %vm2598 = vcmask 1041409
    %v2599 = vsel %vm2598, %v2597, %v2589
    %v2600 = vrot.slane %v2591, 6
    %vm2601 = vcmask 1042434
    %v2602 = vsel %vm2601, %v2600, %v2599
    %v2603 = vrot.slane %v2592, 5
    %vm2604 = vcmask 1043459
    %v2605 = vsel %vm2604, %v2603, %v2602
    %vm2607 = vcmask 125952
    %2608 = vst.msk [vmem:[#allocation5] sm:$0xf] %vm2607, %v2605
    // Predicated region
    $region22: #{tpu_custom_call.1} parent=1 // pred_check
      _
    $region23: #{tpu_custom_call.1} parent=1 // pred_check_branch
      %2610 = sbr.rel (0) target = $region25
    $region24: #{tpu_custom_call.1} parent=1 // pred_region
      %s2612 = ssub.s32 64, 64
      %2613 = vsyncadd [#allocation3], %s2612
      %s2615 = sshll.u32 [#allocation5], 4
      %s2616 = int_to_ptr.vmem [resolvable:$true] %s2615
      %2618 = dma.vmem_to_hbm [thread:$0]  %s2616, 64, %s4, [#allocation3]
    $region25: #{tpu_custom_call.1} parent=1 // pred_fallthru
      _
    // Predicated region
    $region26: #{tpu_custom_call.1} parent=1 // pred_check
      _
    $region27: #{tpu_custom_call.1} parent=1 // pred_check_branch
      %2620 = sbr.rel (0) target = $region29
    $region28: #{tpu_custom_call.1} parent=1 // pred_region
      %2621 = dma.done [#allocation3], 64
    $region29: #{tpu_custom_call.1} parent=1 // pred_fallthru
      _
    %2622 = vsyncpa [#allocation3], 1
    %2623 = vsyncpa [#allocation4], 1

</llo_original>
